<compile_context>
chip_gen: v7x
topology: tpu7x:2x2x1
jax: 0.10.0
libtpu: 0.0.40
codegen_flags: <defaults>
</compile_context>

<pallas_src>
import functools

import jax
import jax.numpy as jnp
from jax.experimental import pallas as pl
from jax.experimental.pallas import tpu as pltpu

LANE = 128


def _round_up(v, m):
    return (v + m - 1) // m * m


def _pad2d(a, rows, cols):
    out = jnp.zeros((rows, cols), a.dtype)
    return out.at[: a.shape[0], : a.shape[1]].set(a)


# ----------------------------------------------------------------------------
# Fused Pallas kernel: all num_layers graph layers in one pallas_call
# ----------------------------------------------------------------------------
def fused_gnn_kernel(x_ref, gsrc_ref, sdst_ref, env_ref, act_ref,
                     wcat_ref, wedge_ref, bedge_ref, bself_ref, out_ref,
                     *, num_layers, d_pad):
    # Layer-invariant operands: loaded once, VMEM-resident across all layers.
    h = x_ref[...]          # bf16 (N_pad, d_pad)
    gsrc = gsrc_ref[...]    # bf16 (E_pad, N_pad)   one-hot gather operator
    sdst = sdst_ref[...]    # bf16 (N_pad, E_pad)   one-hot scatter-sum operator

    out = None
    for layer in range(num_layers):        # static unroll
        w_cat = wcat_ref[layer]            # bf16 (d_pad, 2*d_pad) = [W_msg | W_self]
        w_edge = wedge_ref[layer]          # bf16 (d_pad, d_pad)
        b_edge = bedge_ref[layer]          # f32  (1, d_pad)
        b_self = bself_ref[layer]          # f32  (1, d_pad)
        ea = env_ref[...] if layer == 0 else act_ref[...]   # bf16 (E_pad, d_pad)

        # Single fused node projection (better MXU fill than two thin matmuls).
        hw = jnp.dot(h, w_cat, preferred_element_type=jnp.float32)  # (N_pad, 2*d_pad)
        h_msg = hw[:, :d_pad].astype(jnp.bfloat16)
        h_self = hw[:, d_pad:]

        # Gather source-node features per edge: (E_pad, N_pad) @ (N_pad, d_pad)
        gathered = jnp.dot(gsrc, h_msg, preferred_element_type=jnp.float32)
        # Edge-attribute projection.
        e = jnp.dot(ea, w_edge, preferred_element_type=jnp.float32) + b_edge
        msg = jnp.maximum(gathered + e, 0.0).astype(jnp.bfloat16)   # (E_pad, d_pad)

        # Scatter-sum to destination nodes: (N_pad, E_pad) @ (E_pad, d_pad)
        agg = jnp.dot(sdst, msg, preferred_element_type=jnp.float32)

        out = h_self + b_self + agg           # f32 epilogue (v5e-safe)
        if layer != num_layers - 1:
            out = jnp.maximum(out, 0.0)       # Dropout(eval)=identity, then ReLU
        h = out.astype(jnp.bfloat16)

    out_ref[...] = out                        # lane-dense f32 (N_pad, d_pad)


def _full_spec(a):
    ndim = a.ndim

    def index_map(i):
        return (0,) * ndim

    return pl.BlockSpec(a.shape, index_map)


# ----------------------------------------------------------------------------
# ActionNetwork forward: padding / packing glue + single fused kernel call
# ----------------------------------------------------------------------------
def action_network_forward(params, x, edge_index, env_edge_attr, act_edge_attr):
    """params: list of per-layer dicts; x: (N, in_dim); edge_index: (2, E)."""
    num_layers = len(params)
    n_nodes = x.shape[0]
    n_edges = edge_index.shape[1]
    out_dim = params[-1]["w_msg"].shape[1]

    d_pad = LANE                       # all feature dims fit in one 128-lane slab
    n_pad = _round_up(n_nodes, LANE)   # N is the lane axis of gsrc -> lane-pad
    e_pad = _round_up(n_edges, LANE)   # E is the lane axis of sdst -> lane-pad

    src, dst = edge_index[0], edge_index[1]
    gsrc = _pad2d(jax.nn.one_hot(src, n_pad, dtype=jnp.bfloat16), e_pad, n_pad)
    sdst = _pad2d(jax.nn.one_hot(dst, n_pad, dtype=jnp.bfloat16).T, n_pad, e_pad)

    x_pad = _pad2d(x, n_pad, d_pad).astype(jnp.bfloat16)
    env_pad = _pad2d(env_edge_attr, e_pad, d_pad).astype(jnp.bfloat16)
    act_pad = _pad2d(act_edge_attr, e_pad, d_pad).astype(jnp.bfloat16)

    # Stack per-layer weights along a leading layer axis -> 4 fixed operands.
    wcat_l, wedge_l, bedge_l, bself_l = [], [], [], []
    for p in params:
        d_in, d_out = p["w_msg"].shape
        w_cat = jnp.zeros((d_pad, 2 * d_pad), jnp.float32)
        w_cat = w_cat.at[:d_in, :d_out].set(p["w_msg"])
        w_cat = w_cat.at[:d_in, d_pad:d_pad + d_out].set(p["w_self"])
        wcat_l.append(w_cat.astype(jnp.bfloat16))
        wedge_l.append(_pad2d(p["w_edge"], d_pad, d_pad).astype(jnp.bfloat16))
        bedge_l.append(_pad2d(p["b_edge"], 1, d_pad))
        bself_l.append(_pad2d(p["b_self"], 1, d_pad))
    wcat_all = jnp.stack(wcat_l)     # (L, d_pad, 2*d_pad) bf16
    wedge_all = jnp.stack(wedge_l)   # (L, d_pad, d_pad)   bf16
    bedge_all = jnp.stack(bedge_l)   # (L, 1, d_pad)       f32
    bself_all = jnp.stack(bself_l)   # (L, 1, d_pad)       f32

    args = (x_pad, gsrc, sdst, env_pad, act_pad,
            wcat_all, wedge_all, bedge_all, bself_all)
    kernel = functools.partial(fused_gnn_kernel,
                               num_layers=num_layers, d_pad=d_pad)
    out_pad = pl.pallas_call(
        kernel,
        out_shape=jax.ShapeDtypeStruct((n_pad, d_pad), jnp.float32),
        grid=(1,),
        in_specs=[_full_spec(a) for a in args],
        out_specs=pl.BlockSpec((n_pad, d_pad), lambda i: (0, 0)),
        compiler_params=pltpu.CompilerParams(
            dimension_semantics=("arbitrary",)),
    )(*args)
    return out_pad[:n_nodes, :out_dim]


# ----------------------------------------------------------------------------
# Pure-JAX reference with matching bf16-operand / f32-accumulate casts
# ----------------------------------------------------------------------------
def reference_forward(params, x, edge_index, env_edge_attr, act_edge_attr):
    num_nodes = x.shape[0]
    src, dst = edge_index[0], edge_index[1]
    gsrc = jax.nn.one_hot(src, num_nodes, dtype=jnp.bfloat16)
    sdst = jax.nn.one_hot(dst, num_nodes, dtype=jnp.bfloat16).T
    num_layers = len(params)
    edge_attrs = [env_edge_attr] + (num_layers - 1) * [act_edge_attr]
    h = x.astype(jnp.bfloat16)
    out = None
    for idx, p in enumerate(params):
        wm = p["w_msg"].astype(jnp.bfloat16)
        ws = p["w_self"].astype(jnp.bfloat16)
        we = p["w_edge"].astype(jnp.bfloat16)
        ea = edge_attrs[idx].astype(jnp.bfloat16)
        h_msg = jnp.dot(h, wm, preferred_element_type=jnp.float32)
        h_self = jnp.dot(h, ws, preferred_element_type=jnp.float32)
        gathered = jnp.dot(gsrc, h_msg.astype(jnp.bfloat16),
                           preferred_element_type=jnp.float32)
        e = jnp.dot(ea, we, preferred_element_type=jnp.float32) + p["b_edge"]
        msg = jnp.maximum(gathered + e, 0.0)
        agg = jnp.dot(sdst, msg.astype(jnp.bfloat16),
                      preferred_element_type=jnp.float32)
        out = h_self + p["b_self"] + agg
        if idx != num_layers - 1:
            out = jnp.maximum(out, 0.0)
        h = out.astype(jnp.bfloat16)
    return out


# ----------------------------------------------------------------------------
# Deterministic parameter init
# ----------------------------------------------------------------------------
def init_params(key, in_dim, hidden_dim, out_dim, num_layers,
                env_edge_dim, act_edge_dim):
    params = []
    dims_in = [in_dim] + [hidden_dim] * (num_layers - 1)
    dims_out = [hidden_dim] * (num_layers - 1) + [out_dim]
    edge_dims = [env_edge_dim] + [act_edge_dim] * (num_layers - 1)
    for k in range(num_layers):
        key, k1, k2, k3, k4, k5 = jax.random.split(key, 6)
        d_in, d_out, d_e = dims_in[k], dims_out[k], edge_dims[k]
        params.append({
            "w_msg":  0.1 * jax.random.normal(k1, (d_in, d_out), jnp.float32),
            "w_self": 0.1 * jax.random.normal(k2, (d_in, d_out), jnp.float32),
            "w_edge": 0.1 * jax.random.normal(k3, (d_e, d_out), jnp.float32),
            "b_edge": 0.1 * jax.random.normal(k4, (1, d_out), jnp.float32),
            "b_self": 0.1 * jax.random.normal(k5, (1, d_out), jnp.float32),
        })
    return params


if __name__ == "__main__":
    # small, module-consistent shapes
    N = 16            # nodes
    E = 32            # edges
    IN_DIM = 8
    HIDDEN = 32
    OUT_DIM = 2       # fixed by the module (out_dim=2)
    NUM_LAYERS = 3
    ENV_EDGE_DIM = 6
    ACT_EDGE_DIM = 4

    key = jax.random.PRNGKey(0)
    kx, ke, kenv, kact, kp = jax.random.split(key, 5)

    x = jax.random.normal(kx, (N, IN_DIM), jnp.float32)
    edge_index = jax.random.randint(ke, (2, E), 0, N, dtype=jnp.int32)
    env_edge_attr = jax.random.normal(kenv, (E, ENV_EDGE_DIM), jnp.float32)
    act_edge_attr = jax.random.normal(kact, (E, ACT_EDGE_DIM), jnp.float32)

    params = init_params(kp, IN_DIM, HIDDEN, OUT_DIM, NUM_LAYERS,
                         ENV_EDGE_DIM, ACT_EDGE_DIM)

    out = action_network_forward(params, x, edge_index,
                                 env_edge_attr, act_edge_attr)
    out = jax.block_until_ready(out)

    ref = reference_forward(params, x, edge_index,
                            env_edge_attr, act_edge_attr)
    assert out.shape == (N, OUT_DIM)
    max_err = float(jnp.max(jnp.abs(out - ref)))
    assert jnp.allclose(out, ref, atol=2e-3, rtol=2e-3), max_err

    print("KERNEL_OK")
</pallas_src>

<mosaic_0001>
module attributes {stable_mosaic.version = 11 : i64} {
  func.func @fused_gnn_kernel(%arg0: i32, %arg1: memref<128x128xbf16, #tpu.memory_space<vmem>>, %arg2: memref<128x128xbf16, #tpu.memory_space<vmem>>, %arg3: memref<128x128xbf16, #tpu.memory_space<vmem>>, %arg4: memref<128x128xbf16, #tpu.memory_space<vmem>>, %arg5: memref<128x128xbf16, #tpu.memory_space<vmem>>, %arg6: memref<3x128x256xbf16, #tpu.memory_space<vmem>>, %arg7: memref<3x128x128xbf16, #tpu.memory_space<vmem>>, %arg8: memref<3x1x128xf32, #tpu.memory_space<vmem>>, %arg9: memref<3x1x128xf32, #tpu.memory_space<vmem>>, %arg10: memref<128x128xf32, #tpu.memory_space<vmem>>) attributes {dimension_semantics = [#tpu.dimension_semantics<arbitrary>], iteration_bounds = array<i64: 1>, scalar_prefetch = 0 : i64, scratch_operands = 0 : i64, tpu.core_type = #tpu.core_type<tc>, window_params = [{pipeline_mode = #tpu.pipeline_mode<synchronous>, transform_indices = @transform_0, window_bounds = array<i64: 128, 128>}, {pipeline_mode = #tpu.pipeline_mode<synchronous>, transform_indices = @transform_1, window_bounds = array<i64: 128, 128>}, {pipeline_mode = #tpu.pipeline_mode<synchronous>, transform_indices = @transform_2, window_bounds = array<i64: 128, 128>}, {pipeline_mode = #tpu.pipeline_mode<synchronous>, transform_indices = @transform_3, window_bounds = array<i64: 128, 128>}, {pipeline_mode = #tpu.pipeline_mode<synchronous>, transform_indices = @transform_4, window_bounds = array<i64: 128, 128>}, {pipeline_mode = #tpu.pipeline_mode<synchronous>, transform_indices = @transform_5, window_bounds = array<i64: 3, 128, 256>}, {pipeline_mode = #tpu.pipeline_mode<synchronous>, transform_indices = @transform_6, window_bounds = array<i64: 3, 128, 128>}, {pipeline_mode = #tpu.pipeline_mode<synchronous>, transform_indices = @transform_7, window_bounds = array<i64: 3, 1, 128>}, {pipeline_mode = #tpu.pipeline_mode<synchronous>, transform_indices = @transform_8, window_bounds = array<i64: 3, 1, 128>}, {pipeline_mode = #tpu.pipeline_mode<synchronous>, transform_indices = @transform_9, window_bounds = array<i64: 128, 128>}]} {
    %c0 = arith.constant 0 : index
    %c0_0 = arith.constant 0 : index
    %0 = vector.load %arg1[%c0, %c0_0] : memref<128x128xbf16, #tpu.memory_space<vmem>>, vector<128x128xbf16>
    %c0_1 = arith.constant 0 : index
    %c0_2 = arith.constant 0 : index
    %1 = vector.load %arg2[%c0_1, %c0_2] : memref<128x128xbf16, #tpu.memory_space<vmem>>, vector<128x128xbf16>
    %c0_3 = arith.constant 0 : index
    %c0_4 = arith.constant 0 : index
    %2 = vector.load %arg3[%c0_3, %c0_4] : memref<128x128xbf16, #tpu.memory_space<vmem>>, vector<128x128xbf16>
    %c0_5 = arith.constant 0 : index
    %c0_6 = arith.constant 0 : index
    %c0_7 = arith.constant 0 : index
    %3 = vector.load %arg6[%c0_5, %c0_6, %c0_7] : memref<3x128x256xbf16, #tpu.memory_space<vmem>>, vector<1x128x256xbf16>
    %4 = vector.shape_cast %3 : vector<1x128x256xbf16> to vector<128x256xbf16>
    %c0_8 = arith.constant 0 : index
    %c0_9 = arith.constant 0 : index
    %c0_10 = arith.constant 0 : index
    %5 = vector.load %arg7[%c0_8, %c0_9, %c0_10] : memref<3x128x128xbf16, #tpu.memory_space<vmem>>, vector<1x128x128xbf16>
    %6 = vector.shape_cast %5 : vector<1x128x128xbf16> to vector<128x128xbf16>
    %c0_11 = arith.constant 0 : index
    %c0_12 = arith.constant 0 : index
    %c0_13 = arith.constant 0 : index
    %7 = vector.load %arg8[%c0_11, %c0_12, %c0_13] : memref<3x1x128xf32, #tpu.memory_space<vmem>>, vector<1x1x128xf32>
    %8 = vector.shape_cast %7 : vector<1x1x128xf32> to vector<1x128xf32>
    %c0_14 = arith.constant 0 : index
    %c0_15 = arith.constant 0 : index
    %c0_16 = arith.constant 0 : index
    %9 = vector.load %arg9[%c0_14, %c0_15, %c0_16] : memref<3x1x128xf32, #tpu.memory_space<vmem>>, vector<1x1x128xf32>
    %10 = vector.shape_cast %9 : vector<1x1x128xf32> to vector<1x128xf32>
    %c0_17 = arith.constant 0 : index
    %c0_18 = arith.constant 0 : index
    %11 = vector.load %arg4[%c0_17, %c0_18] : memref<128x128xbf16, #tpu.memory_space<vmem>>, vector<128x128xbf16>
    %cst = arith.constant dense<0.000000e+00> : vector<128x256xf32>
    %12 = tpu.matmul %0, %4, %cst {dimension_numbers = #tpu.dot_dimension_numbers<[1], [0], [0], [1], [0, 0, 1, 1], [], []>} : vector<128x128xbf16>, vector<128x256xbf16>, vector<128x256xf32> -> vector<128x256xf32>
    %13 = vector.extract_strided_slice %12 {offsets = [0, 0], sizes = [128, 128], strides = [1, 1]} : vector<128x256xf32> to vector<128x128xf32>
    %14 = arith.truncf %13 : vector<128x128xf32> to vector<128x128xbf16>
    %15 = vector.extract_strided_slice %12 {offsets = [0, 128], sizes = [128, 128], strides = [1, 1]} : vector<128x256xf32> to vector<128x128xf32>
    %cst_19 = arith.constant dense<0.000000e+00> : vector<128x128xf32>
    %16 = tpu.matmul %1, %14, %cst_19 {dimension_numbers = #tpu.dot_dimension_numbers<[1], [0], [0], [1], [0, 0, 1, 1], [], []>} : vector<128x128xbf16>, vector<128x128xbf16>, vector<128x128xf32> -> vector<128x128xf32>
    %cst_20 = arith.constant dense<0.000000e+00> : vector<128x128xf32>
    %17 = tpu.matmul %11, %6, %cst_20 {dimension_numbers = #tpu.dot_dimension_numbers<[1], [0], [0], [1], [0, 0, 1, 1], [], []>} : vector<128x128xbf16>, vector<128x128xbf16>, vector<128x128xf32> -> vector<128x128xf32>
    %18 = vector.broadcast %8 : vector<1x128xf32> to vector<128x128xf32>
    %19 = arith.addf %17, %18 : vector<128x128xf32>
    %20 = arith.addf %16, %19 : vector<128x128xf32>
    %cst_21 = arith.constant 0.000000e+00 : f32
    %21 = vector.broadcast %cst_21 : f32 to vector<128x128xf32>
    %22 = arith.maximumf %20, %21 : vector<128x128xf32>
    %23 = arith.truncf %22 : vector<128x128xf32> to vector<128x128xbf16>
    %cst_22 = arith.constant dense<0.000000e+00> : vector<128x128xf32>
    %24 = tpu.matmul %2, %23, %cst_22 {dimension_numbers = #tpu.dot_dimension_numbers<[1], [0], [0], [1], [0, 0, 1, 1], [], []>} : vector<128x128xbf16>, vector<128x128xbf16>, vector<128x128xf32> -> vector<128x128xf32>
    %25 = vector.broadcast %10 : vector<1x128xf32> to vector<128x128xf32>
    %26 = arith.addf %15, %25 : vector<128x128xf32>
    %27 = arith.addf %26, %24 : vector<128x128xf32>
    %cst_23 = arith.constant 0.000000e+00 : f32
    %28 = vector.broadcast %cst_23 : f32 to vector<128x128xf32>
    %29 = arith.maximumf %27, %28 : vector<128x128xf32>
    %30 = arith.truncf %29 : vector<128x128xf32> to vector<128x128xbf16>
    %c1 = arith.constant 1 : index
    %c0_24 = arith.constant 0 : index
    %c0_25 = arith.constant 0 : index
    %31 = vector.load %arg6[%c1, %c0_24, %c0_25] : memref<3x128x256xbf16, #tpu.memory_space<vmem>>, vector<1x128x256xbf16>
    %32 = vector.shape_cast %31 : vector<1x128x256xbf16> to vector<128x256xbf16>
    %c1_26 = arith.constant 1 : index
    %c0_27 = arith.constant 0 : index
    %c0_28 = arith.constant 0 : index
    %33 = vector.load %arg7[%c1_26, %c0_27, %c0_28] : memref<3x128x128xbf16, #tpu.memory_space<vmem>>, vector<1x128x128xbf16>
    %34 = vector.shape_cast %33 : vector<1x128x128xbf16> to vector<128x128xbf16>
    %c1_29 = arith.constant 1 : index
    %c0_30 = arith.constant 0 : index
    %c0_31 = arith.constant 0 : index
    %35 = vector.load %arg8[%c1_29, %c0_30, %c0_31] : memref<3x1x128xf32, #tpu.memory_space<vmem>>, vector<1x1x128xf32>
    %36 = vector.shape_cast %35 : vector<1x1x128xf32> to vector<1x128xf32>
    %c1_32 = arith.constant 1 : index
    %c0_33 = arith.constant 0 : index
    %c0_34 = arith.constant 0 : index
    %37 = vector.load %arg9[%c1_32, %c0_33, %c0_34] : memref<3x1x128xf32, #tpu.memory_space<vmem>>, vector<1x1x128xf32>
    %38 = vector.shape_cast %37 : vector<1x1x128xf32> to vector<1x128xf32>
    %c0_35 = arith.constant 0 : index
    %c0_36 = arith.constant 0 : index
    %39 = vector.load %arg5[%c0_35, %c0_36] : memref<128x128xbf16, #tpu.memory_space<vmem>>, vector<128x128xbf16>
    %cst_37 = arith.constant dense<0.000000e+00> : vector<128x256xf32>
    %40 = tpu.matmul %30, %32, %cst_37 {dimension_numbers = #tpu.dot_dimension_numbers<[1], [0], [0], [1], [0, 0, 1, 1], [], []>} : vector<128x128xbf16>, vector<128x256xbf16>, vector<128x256xf32> -> vector<128x256xf32>
    %41 = vector.extract_strided_slice %40 {offsets = [0, 0], sizes = [128, 128], strides = [1, 1]} : vector<128x256xf32> to vector<128x128xf32>
    %42 = arith.truncf %41 : vector<128x128xf32> to vector<128x128xbf16>
    %43 = vector.extract_strided_slice %40 {offsets = [0, 128], sizes = [128, 128], strides = [1, 1]} : vector<128x256xf32> to vector<128x128xf32>
    %cst_38 = arith.constant dense<0.000000e+00> : vector<128x128xf32>
    %44 = tpu.matmul %1, %42, %cst_38 {dimension_numbers = #tpu.dot_dimension_numbers<[1], [0], [0], [1], [0, 0, 1, 1], [], []>} : vector<128x128xbf16>, vector<128x128xbf16>, vector<128x128xf32> -> vector<128x128xf32>
    %cst_39 = arith.constant dense<0.000000e+00> : vector<128x128xf32>
    %45 = tpu.matmul %39, %34, %cst_39 {dimension_numbers = #tpu.dot_dimension_numbers<[1], [0], [0], [1], [0, 0, 1, 1], [], []>} : vector<128x128xbf16>, vector<128x128xbf16>, vector<128x128xf32> -> vector<128x128xf32>
    %46 = vector.broadcast %36 : vector<1x128xf32> to vector<128x128xf32>
    %47 = arith.addf %45, %46 : vector<128x128xf32>
    %48 = arith.addf %44, %47 : vector<128x128xf32>
    %cst_40 = arith.constant 0.000000e+00 : f32
    %49 = vector.broadcast %cst_40 : f32 to vector<128x128xf32>
    %50 = arith.maximumf %48, %49 : vector<128x128xf32>
    %51 = arith.truncf %50 : vector<128x128xf32> to vector<128x128xbf16>
    %cst_41 = arith.constant dense<0.000000e+00> : vector<128x128xf32>
    %52 = tpu.matmul %2, %51, %cst_41 {dimension_numbers = #tpu.dot_dimension_numbers<[1], [0], [0], [1], [0, 0, 1, 1], [], []>} : vector<128x128xbf16>, vector<128x128xbf16>, vector<128x128xf32> -> vector<128x128xf32>
    %53 = vector.broadcast %38 : vector<1x128xf32> to vector<128x128xf32>
    %54 = arith.addf %43, %53 : vector<128x128xf32>
    %55 = arith.addf %54, %52 : vector<128x128xf32>
    %cst_42 = arith.constant 0.000000e+00 : f32
    %56 = vector.broadcast %cst_42 : f32 to vector<128x128xf32>
    %57 = arith.maximumf %55, %56 : vector<128x128xf32>
    %58 = arith.truncf %57 : vector<128x128xf32> to vector<128x128xbf16>
    %c2 = arith.constant 2 : index
    %c0_43 = arith.constant 0 : index
    %c0_44 = arith.constant 0 : index
    %59 = vector.load %arg6[%c2, %c0_43, %c0_44] : memref<3x128x256xbf16, #tpu.memory_space<vmem>>, vector<1x128x256xbf16>
    %60 = vector.shape_cast %59 : vector<1x128x256xbf16> to vector<128x256xbf16>
    %c2_45 = arith.constant 2 : index
    %c0_46 = arith.constant 0 : index
    %c0_47 = arith.constant 0 : index
    %61 = vector.load %arg7[%c2_45, %c0_46, %c0_47] : memref<3x128x128xbf16, #tpu.memory_space<vmem>>, vector<1x128x128xbf16>
    %62 = vector.shape_cast %61 : vector<1x128x128xbf16> to vector<128x128xbf16>
    %c2_48 = arith.constant 2 : index
    %c0_49 = arith.constant 0 : index
    %c0_50 = arith.constant 0 : index
    %63 = vector.load %arg8[%c2_48, %c0_49, %c0_50] : memref<3x1x128xf32, #tpu.memory_space<vmem>>, vector<1x1x128xf32>
    %64 = vector.shape_cast %63 : vector<1x1x128xf32> to vector<1x128xf32>
    %c2_51 = arith.constant 2 : index
    %c0_52 = arith.constant 0 : index
    %c0_53 = arith.constant 0 : index
    %65 = vector.load %arg9[%c2_51, %c0_52, %c0_53] : memref<3x1x128xf32, #tpu.memory_space<vmem>>, vector<1x1x128xf32>
    %66 = vector.shape_cast %65 : vector<1x1x128xf32> to vector<1x128xf32>
    %c0_54 = arith.constant 0 : index
    %c0_55 = arith.constant 0 : index
    %67 = vector.load %arg5[%c0_54, %c0_55] : memref<128x128xbf16, #tpu.memory_space<vmem>>, vector<128x128xbf16>
    %cst_56 = arith.constant dense<0.000000e+00> : vector<128x256xf32>
    %68 = tpu.matmul %58, %60, %cst_56 {dimension_numbers = #tpu.dot_dimension_numbers<[1], [0], [0], [1], [0, 0, 1, 1], [], []>} : vector<128x128xbf16>, vector<128x256xbf16>, vector<128x256xf32> -> vector<128x256xf32>
    %69 = vector.extract_strided_slice %68 {offsets = [0, 0], sizes = [128, 128], strides = [1, 1]} : vector<128x256xf32> to vector<128x128xf32>
    %70 = arith.truncf %69 : vector<128x128xf32> to vector<128x128xbf16>
    %71 = vector.extract_strided_slice %68 {offsets = [0, 128], sizes = [128, 128], strides = [1, 1]} : vector<128x256xf32> to vector<128x128xf32>
    %cst_57 = arith.constant dense<0.000000e+00> : vector<128x128xf32>
    %72 = tpu.matmul %1, %70, %cst_57 {dimension_numbers = #tpu.dot_dimension_numbers<[1], [0], [0], [1], [0, 0, 1, 1], [], []>} : vector<128x128xbf16>, vector<128x128xbf16>, vector<128x128xf32> -> vector<128x128xf32>
    %cst_58 = arith.constant dense<0.000000e+00> : vector<128x128xf32>
    %73 = tpu.matmul %67, %62, %cst_58 {dimension_numbers = #tpu.dot_dimension_numbers<[1], [0], [0], [1], [0, 0, 1, 1], [], []>} : vector<128x128xbf16>, vector<128x128xbf16>, vector<128x128xf32> -> vector<128x128xf32>
    %74 = vector.broadcast %64 : vector<1x128xf32> to vector<128x128xf32>
    %75 = arith.addf %73, %74 : vector<128x128xf32>
    %76 = arith.addf %72, %75 : vector<128x128xf32>
    %cst_59 = arith.constant 0.000000e+00 : f32
    %77 = vector.broadcast %cst_59 : f32 to vector<128x128xf32>
    %78 = arith.maximumf %76, %77 : vector<128x128xf32>
    %79 = arith.truncf %78 : vector<128x128xf32> to vector<128x128xbf16>
    %cst_60 = arith.constant dense<0.000000e+00> : vector<128x128xf32>
    %80 = tpu.matmul %2, %79, %cst_60 {dimension_numbers = #tpu.dot_dimension_numbers<[1], [0], [0], [1], [0, 0, 1, 1], [], []>} : vector<128x128xbf16>, vector<128x128xbf16>, vector<128x128xf32> -> vector<128x128xf32>
    %81 = vector.broadcast %66 : vector<1x128xf32> to vector<128x128xf32>
    %82 = arith.addf %71, %81 : vector<128x128xf32>
    %83 = arith.addf %82, %80 : vector<128x128xf32>
    %c0_61 = arith.constant 0 : index
    %c0_62 = arith.constant 0 : index
    %84 = vector.load %arg10[%c0_61, %c0_62] : memref<128x128xf32, #tpu.memory_space<vmem>>, vector<128x128xf32>
    tpu.vector_store %arg10[%c0_61, %c0_62], %83 {strides = array<i32>} : memref<128x128xf32, #tpu.memory_space<vmem>>, vector<128x128xf32>,
    return
  }
  func.func @transform_0(%arg0: i32) -> (i32, i32) {
    %c0_i32 = arith.constant 0 : i32
    %c0_i32_0 = arith.constant 0 : i32
    %c0_i32_1 = arith.constant 0 : i32
    return %c0_i32, %c0_i32_0 : i32, i32
  }
  func.func @transform_1(%arg0: i32) -> (i32, i32) {
    %c0_i32 = arith.constant 0 : i32
    %c0_i32_0 = arith.constant 0 : i32
    %c0_i32_1 = arith.constant 0 : i32
    return %c0_i32, %c0_i32_0 : i32, i32
  }
  func.func @transform_2(%arg0: i32) -> (i32, i32) {
    %c0_i32 = arith.constant 0 : i32
    %c0_i32_0 = arith.constant 0 : i32
    %c0_i32_1 = arith.constant 0 : i32
    return %c0_i32, %c0_i32_0 : i32, i32
  }
  func.func @transform_3(%arg0: i32) -> (i32, i32) {
    %c0_i32 = arith.constant 0 : i32
    %c0_i32_0 = arith.constant 0 : i32
    %c0_i32_1 = arith.constant 0 : i32
    return %c0_i32, %c0_i32_0 : i32, i32
  }
  func.func @transform_4(%arg0: i32) -> (i32, i32) {
    %c0_i32 = arith.constant 0 : i32
    %c0_i32_0 = arith.constant 0 : i32
    %c0_i32_1 = arith.constant 0 : i32
    return %c0_i32, %c0_i32_0 : i32, i32
  }
  func.func @transform_5(%arg0: i32) -> (i32, i32, i32) {
    %c0_i32 = arith.constant 0 : i32
    %c0_i32_0 = arith.constant 0 : i32
    %c0_i32_1 = arith.constant 0 : i32
    %c0_i32_2 = arith.constant 0 : i32
    return %c0_i32, %c0_i32_0, %c0_i32_1 : i32, i32, i32
  }
  func.func @transform_6(%arg0: i32) -> (i32, i32, i32) {
    %c0_i32 = arith.constant 0 : i32
    %c0_i32_0 = arith.constant 0 : i32
    %c0_i32_1 = arith.constant 0 : i32
    %c0_i32_2 = arith.constant 0 : i32
    return %c0_i32, %c0_i32_0, %c0_i32_1 : i32, i32, i32
  }
  func.func @transform_7(%arg0: i32) -> (i32, i32, i32) {
    %c0_i32 = arith.constant 0 : i32
    %c0_i32_0 = arith.constant 0 : i32
    %c0_i32_1 = arith.constant 0 : i32
    %c0_i32_2 = arith.constant 0 : i32
    return %c0_i32, %c0_i32_0, %c0_i32_1 : i32, i32, i32
  }
  func.func @transform_8(%arg0: i32) -> (i32, i32, i32) {
    %c0_i32 = arith.constant 0 : i32
    %c0_i32_0 = arith.constant 0 : i32
    %c0_i32_1 = arith.constant 0 : i32
    %c0_i32_2 = arith.constant 0 : i32
    return %c0_i32, %c0_i32_0, %c0_i32_1 : i32, i32, i32
  }
  func.func @transform_9(%arg0: i32) -> (i32, i32) {
    %c0_i32 = arith.constant 0 : i32
    %c0_i32_0 = arith.constant 0 : i32
    %c0_i32_1 = arith.constant 0 : i32
    return %c0_i32, %c0_i32_0 : i32, i32
  }
}

</mosaic_0001>

<llo_original>
// kernel: tpu_custom_call.1
$region0: #{tpu_custom_call.1}
  #allocation0 [shape = 'u32[]', space=smem, size = 0x4, offset = 0x4, fixed_abs, tag = 'smem constant byte address 0x4 - core index']
  #allocation1 [shape = 'u32[144,128]{1,0:T(1,128)}', space=vmem, size = 0x12000, scoped, tag = 'internal scratch']
  %s0 = inlined_call_operand.hbm [shape: bf16[128,128], index: 0, kind: input, shape index: {}]
  %s1 = inlined_call_operand.hbm [shape: bf16[128,128], index: 1, kind: input, shape index: {}]
  %s2 = inlined_call_operand.hbm [shape: bf16[128,128], index: 2, kind: input, shape index: {}]
  %s3 = inlined_call_operand.hbm [shape: bf16[128,128], index: 3, kind: input, shape index: {}]
  %s4 = inlined_call_operand.hbm [shape: bf16[128,128], index: 4, kind: input, shape index: {}]
  %s5 = inlined_call_operand.hbm [shape: bf16[3,128,256], index: 5, kind: input, shape index: {}]
  %s6 = inlined_call_operand.hbm [shape: bf16[3,128,128], index: 6, kind: input, shape index: {}]
  %s7 = inlined_call_operand.vmem [shape: f32[3,1,128], index: 7, kind: input, shape index: {}]
  %s8 = inlined_call_operand.vmem [shape: f32[3,1,128], index: 8, kind: input, shape index: {}]
  %s9 = inlined_call_operand.hbm [shape: f32[128,128], index: 9, kind: output, shape index: {}]
  %s10 = sld [smem:[#allocation0]]
  $region74: #{tpu_custom_call.1} parent=0
    _
  %s12 = ssub.s32 1, %s10
  %s13 = scalar_select 0, %s12, %s10
  $region1: #{tpu_custom_call.1} parent=0
    #allocation2 [shape = 'u8[32768]{0}', space=vmem, size = 0x8000, scoped, tag = 'input window, operand 0, single buffered']
    #allocation3 [shape = 's32[1]{0}', space=sflag, size = 0x4, scoped, tag = 'scoped memory for tpu_custom_call.1']
    #allocation4 [shape = 's32[1]{0}', space=sflag, size = 0x4, scoped, tag = 'scoped memory for tpu_custom_call.1']
    #allocation5 [shape = 'u8[32768]{0}', space=vmem, size = 0x8000, scoped, tag = 'input window, operand 1, single buffered']
    #allocation6 [shape = 's32[1]{0}', space=sflag, size = 0x4, scoped, tag = 'scoped memory for tpu_custom_call.1']
    #allocation7 [shape = 'u8[32768]{0}', space=vmem, size = 0x8000, scoped, tag = 'input window, operand 2, single buffered']
    #allocation8 [shape = 'u8[32768]{0}', space=vmem, size = 0x8000, scoped, tag = 'input window, operand 3, single buffered']
    #allocation9 [shape = 's32[1]{0}', space=sflag, size = 0x4, scoped, tag = 'scoped memory for tpu_custom_call.1']
    #allocation10 [shape = 'u8[32768]{0}', space=vmem, size = 0x8000, scoped, tag = 'input window, operand 4, single buffered']
    #allocation11 [shape = 'u8[196608]{0}', space=vmem, size = 0x30000, scoped, tag = 'input window, operand 5, single buffered']
    #allocation12 [shape = 's32[1]{0}', space=sflag, size = 0x4, scoped, tag = 'scoped memory for tpu_custom_call.1']
    #allocation13 [shape = 'u8[98304]{0}', space=vmem, size = 0x18000, scoped, tag = 'input window, operand 6, single buffered']
    #allocation14 [shape = 'u8[65536]{0}', space=vmem, size = 0x10000, scoped, tag = 'output window, operand 0, single buffered']
    %14 = vsyncpa [#allocation3], 0
    %15 = vsyncpa [#allocation6], 0
    %16 = vsyncpa [#allocation9], 0
    %17 = vsyncpa [#allocation12], 0
    %18 = vsyncpa [#allocation4], 0
    // Predicated region
    $region2: #{tpu_custom_call.1} parent=1 // pred_check
      _
    $region3: #{tpu_custom_call.1} parent=1 // pred_check_branch
      %20 = sbr.rel (0) target = $region5
    $region4: #{tpu_custom_call.1} parent=1 // pred_region
      %s22 = ssub.s32 1024, 1024
      %23 = vsyncadd [#allocation3], %s22
      %s24 = sshll.u32 [#allocation2], 4
      %s25 = int_to_ptr.vmem [resolvable:$true] %s24
      %30 = dma.hbm_to_vmem [thread:$0]  %s0, 1024, %s25, [#allocation3], 64, 64, 4
    $region5: #{tpu_custom_call.1} parent=1 // pred_fallthru
      _
    // Predicated region
    $region6: #{tpu_custom_call.1} parent=1 // pred_check
      _
    $region7: #{tpu_custom_call.1} parent=1 // pred_check_branch
      %32 = sbr.rel (0) target = $region9
    $region8: #{tpu_custom_call.1} parent=1 // pred_region
      %s34 = ssub.s32 1024, 1024
      %35 = vsyncadd [#allocation6], %s34
      %s36 = sshll.u32 [#allocation5], 4
      %s37 = int_to_ptr.vmem [resolvable:$true] %s36
      %42 = dma.hbm_to_vmem [thread:$0]  %s1, 1024, %s37, [#allocation6], 64, 64, 4
    $region9: #{tpu_custom_call.1} parent=1 // pred_fallthru
      _
    // Predicated region
    $region10: #{tpu_custom_call.1} parent=1 // pred_check
      _
    $region11: #{tpu_custom_call.1} parent=1 // pred_check_branch
      %44 = sbr.rel (0) target = $region13
    $region12: #{tpu_custom_call.1} parent=1 // pred_region
      %s46 = ssub.s32 1024, 1024
      %47 = vsyncadd [#allocation6], %s46
      %s48 = sshll.u32 [#allocation7], 4
      %s49 = int_to_ptr.vmem [resolvable:$true] %s48
      %54 = dma.hbm_to_vmem [thread:$0]  %s2, 1024, %s49, [#allocation6], 64, 64, 4
    $region13: #{tpu_custom_call.1} parent=1 // pred_fallthru
      _
    // Predicated region
    $region14: #{tpu_custom_call.1} parent=1 // pred_check
      _
    $region15: #{tpu_custom_call.1} parent=1 // pred_check_branch
      %56 = sbr.rel (0) target = $region17
    $region16: #{tpu_custom_call.1} parent=1 // pred_region
      %s58 = ssub.s32 1024, 1024
      %59 = vsyncadd [#allocation9], %s58
      %s60 = sshll.u32 [#allocation8], 4
      %s61 = int_to_ptr.vmem [resolvable:$true] %s60
      %66 = dma.hbm_to_vmem [thread:$0]  %s3, 1024, %s61, [#allocation9], 64, 64, 4
    $region17: #{tpu_custom_call.1} parent=1 // pred_fallthru
      _
    // Predicated region
    $region18: #{tpu_custom_call.1} parent=1 // pred_check
      _
    $region19: #{tpu_custom_call.1} parent=1 // pred_check_branch
      %68 = sbr.rel (0) target = $region21
    $region20: #{tpu_custom_call.1} parent=1 // pred_region
      %s70 = ssub.s32 1024, 1024
      %71 = vsyncadd [#allocation9], %s70
      %s72 = sshll.u32 [#allocation10], 4
      %s73 = int_to_ptr.vmem [resolvable:$true] %s72
      %78 = dma.hbm_to_vmem [thread:$0]  %s4, 1024, %s73, [#allocation9], 64, 64, 4
    $region21: #{tpu_custom_call.1} parent=1 // pred_fallthru
      _
    // Predicated region
    $region22: #{tpu_custom_call.1} parent=1 // pred_check
      _
    $region23: #{tpu_custom_call.1} parent=1 // pred_check_branch
      %80 = sbr.rel (0) target = $region25
    $region24: #{tpu_custom_call.1} parent=1 // pred_region
      %s82 = ssub.s32 6144, 6144
      %83 = vsyncadd [#allocation12], %s82
      %s84 = sshll.u32 [#allocation11], 4
      %s85 = int_to_ptr.vmem [resolvable:$true] %s84
      %90 = dma.hbm_to_vmem [thread:$0]  %s5, 6144, %s85, [#allocation12], 128, 128, 8
    $region25: #{tpu_custom_call.1} parent=1 // pred_fallthru
      _
    // Predicated region
    $region26: #{tpu_custom_call.1} parent=1 // pred_check
      _
    $region27: #{tpu_custom_call.1} parent=1 // pred_check_branch
      %92 = sbr.rel (0) target = $region29
    $region28: #{tpu_custom_call.1} parent=1 // pred_region
      %s94 = ssub.s32 3072, 3072
      %95 = vsyncadd [#allocation12], %s94
      %s96 = sshll.u32 [#allocation13], 4
      %s97 = int_to_ptr.vmem [resolvable:$true] %s96
      %102 = dma.hbm_to_vmem [thread:$0]  %s6, 3072, %s97, [#allocation12], 64, 64, 4
    $region29: #{tpu_custom_call.1} parent=1 // pred_fallthru
      _
    // Predicated region
    $region30: #{tpu_custom_call.1} parent=1 // pred_check
      _
    $region31: #{tpu_custom_call.1} parent=1 // pred_check_branch
      %104 = sbr.rel (0) target = $region33
    $region32: #{tpu_custom_call.1} parent=1 // pred_region
      _
    $region33: #{tpu_custom_call.1} parent=1 // pred_fallthru
      _
    // Predicated region
    $region34: #{tpu_custom_call.1} parent=1 // pred_check
      _
    $region35: #{tpu_custom_call.1} parent=1 // pred_check_branch
      %106 = sbr.rel (0) target = $region37
    $region36: #{tpu_custom_call.1} parent=1 // pred_region
      _
    $region37: #{tpu_custom_call.1} parent=1 // pred_fallthru
      _
    // Predicated region
    $region38: #{tpu_custom_call.1} parent=1 // pred_check
      _
    $region39: #{tpu_custom_call.1} parent=1 // pred_check_branch
      %108 = sbr.rel (0) target = $region41
    $region40: #{tpu_custom_call.1} parent=1 // pred_region
      %109 = dma.done [#allocation3], 1024
    $region41: #{tpu_custom_call.1} parent=1 // pred_fallthru
      _
    // Predicated region
    $region42: #{tpu_custom_call.1} parent=1 // pred_check
      _
    $region43: #{tpu_custom_call.1} parent=1 // pred_check_branch
      %111 = sbr.rel (0) target = $region45
    $region44: #{tpu_custom_call.1} parent=1 // pred_region
      %112 = dma.done [#allocation6], 1024
    $region45: #{tpu_custom_call.1} parent=1 // pred_fallthru
      _
    // Predicated region
    $region46: #{tpu_custom_call.1} parent=1 // pred_check
      _
    $region47: #{tpu_custom_call.1} parent=1 // pred_check_branch
      %114 = sbr.rel (0) target = $region49
    $region48: #{tpu_custom_call.1} parent=1 // pred_region
      %115 = dma.done [#allocation6], 1024
    $region49: #{tpu_custom_call.1} parent=1 // pred_fallthru
      _
    // Predicated region
    $region50: #{tpu_custom_call.1} parent=1 // pred_check
      _
    $region51: #{tpu_custom_call.1} parent=1 // pred_check_branch
      %117 = sbr.rel (0) target = $region53
    $region52: #{tpu_custom_call.1} parent=1 // pred_region
      %118 = dma.done [#allocation9], 1024
    $region53: #{tpu_custom_call.1} parent=1 // pred_fallthru
      _
    // Predicated region
    $region54: #{tpu_custom_call.1} parent=1 // pred_check
      _
    $region55: #{tpu_custom_call.1} parent=1 // pred_check_branch
      %120 = sbr.rel (0) target = $region57
    $region56: #{tpu_custom_call.1} parent=1 // pred_region
      %121 = dma.done [#allocation9], 1024
    $region57: #{tpu_custom_call.1} parent=1 // pred_fallthru
      _
    // Predicated region
    $region58: #{tpu_custom_call.1} parent=1 // pred_check
      _
    $region59: #{tpu_custom_call.1} parent=1 // pred_check_branch
      %123 = sbr.rel (0) target = $region61
    $region60: #{tpu_custom_call.1} parent=1 // pred_region
      %124 = dma.done [#allocation12], 6144
    $region61: #{tpu_custom_call.1} parent=1 // pred_fallthru
      _
    // Predicated region
    $region62: #{tpu_custom_call.1} parent=1 // pred_check
      _
    $region63: #{tpu_custom_call.1} parent=1 // pred_check_branch
      %126 = sbr.rel (0) target = $region65
    $region64: #{tpu_custom_call.1} parent=1 // pred_region
      %127 = dma.done [#allocation12], 3072
    $region65: #{tpu_custom_call.1} parent=1 // pred_fallthru
      _
    %v129 = vld [vmem:[#allocation2] sm:$0xf]
    %v130 = vld [vmem:[#allocation2 + $0x4] sm:$0xf]
    %v131 = vld [vmem:[#allocation2 + $0x8] sm:$0xf]
    %v132 = vld [vmem:[#allocation2 + $0xc] sm:$0xf]
    %v133 = vld [vmem:[#allocation2 + $0x10] sm:$0xf]
    %v134 = vld [vmem:[#allocation2 + $0x14] sm:$0xf]
    %v135 = vld [vmem:[#allocation2 + $0x18] sm:$0xf]
    %v136 = vld [vmem:[#allocation2 + $0x1c] sm:$0xf]
    %v137 = vld [vmem:[#allocation2 + $0x20] sm:$0xf]
    %v138 = vld [vmem:[#allocation2 + $0x24] sm:$0xf]
    %v139 = vld [vmem:[#allocation2 + $0x28] sm:$0xf]
    %v140 = vld [vmem:[#allocation2 + $0x2c] sm:$0xf]
    %v141 = vld [vmem:[#allocation2 + $0x30] sm:$0xf]
    %v142 = vld [vmem:[#allocation2 + $0x34] sm:$0xf]
    %v143 = vld [vmem:[#allocation2 + $0x38] sm:$0xf]
    %v144 = vld [vmem:[#allocation2 + $0x3c] sm:$0xf]
    %v145 = vld [vmem:[#allocation5] sm:$0xf]
    %v146 = vld [vmem:[#allocation5 + $0x4] sm:$0xf]
    %v147 = vld [vmem:[#allocation5 + $0x8] sm:$0xf]
    %v148 = vld [vmem:[#allocation5 + $0xc] sm:$0xf]
    %v149 = vld [vmem:[#allocation5 + $0x10] sm:$0xf]
    %v150 = vld [vmem:[#allocation5 + $0x14] sm:$0xf]
    %v151 = vld [vmem:[#allocation5 + $0x18] sm:$0xf]
    %v152 = vld [vmem:[#allocation5 + $0x1c] sm:$0xf]
    %v153 = vld [vmem:[#allocation5 + $0x20] sm:$0xf]
    %v154 = vld [vmem:[#allocation5 + $0x24] sm:$0xf]
    %v155 = vld [vmem:[#allocation5 + $0x28] sm:$0xf]
    %v156 = vld [vmem:[#allocation5 + $0x2c] sm:$0xf]
    %v157 = vld [vmem:[#allocation5 + $0x30] sm:$0xf]
    %v158 = vld [vmem:[#allocation5 + $0x34] sm:$0xf]
    %v159 = vld [vmem:[#allocation5 + $0x38] sm:$0xf]
    %v160 = vld [vmem:[#allocation5 + $0x3c] sm:$0xf]
    %v161 = vld [vmem:[#allocation7] sm:$0xf]
    %v162 = vld [vmem:[#allocation7 + $0x4] sm:$0xf]
    %v163 = vld [vmem:[#allocation7 + $0x8] sm:$0xf]
    %v164 = vld [vmem:[#allocation7 + $0xc] sm:$0xf]
    %v165 = vld [vmem:[#allocation7 + $0x10] sm:$0xf]
    %v166 = vld [vmem:[#allocation7 + $0x14] sm:$0xf]
    %v167 = vld [vmem:[#allocation7 + $0x18] sm:$0xf]
    %v168 = vld [vmem:[#allocation7 + $0x1c] sm:$0xf]
    %v169 = vld [vmem:[#allocation7 + $0x20] sm:$0xf]
    %v170 = vld [vmem:[#allocation7 + $0x24] sm:$0xf]
    %v171 = vld [vmem:[#allocation7 + $0x28] sm:$0xf]
    %v172 = vld [vmem:[#allocation7 + $0x2c] sm:$0xf]
    %v173 = vld [vmem:[#allocation7 + $0x30] sm:$0xf]
    %v174 = vld [vmem:[#allocation7 + $0x34] sm:$0xf]
    %v175 = vld [vmem:[#allocation7 + $0x38] sm:$0xf]
    %v176 = vld [vmem:[#allocation7 + $0x3c] sm:$0xf]
    %v177 = vld [vmem:[#allocation11] sm:$0xff]
    %v178 = vld [vmem:[#allocation11 + $0x8] sm:$0xff]
    %v179 = vld [vmem:[#allocation11 + $0x10] sm:$0xff]
    %v180 = vld [vmem:[#allocation11 + $0x18] sm:$0xff]
    %v181 = vld [vmem:[#allocation11 + $0x20] sm:$0xff]
    %v182 = vld [vmem:[#allocation11 + $0x28] sm:$0xff]
    %v183 = vld [vmem:[#allocation11 + $0x30] sm:$0xff]
    %v184 = vld [vmem:[#allocation11 + $0x38] sm:$0xff]
    %v185 = vld [vmem:[#allocation11 + $0x40] sm:$0xff]
    %v186 = vld [vmem:[#allocation11 + $0x48] sm:$0xff]
    %v187 = vld [vmem:[#allocation11 + $0x50] sm:$0xff]
    %v188 = vld [vmem:[#allocation11 + $0x58] sm:$0xff]
    %v189 = vld [vmem:[#allocation11 + $0x60] sm:$0xff]
    %v190 = vld [vmem:[#allocation11 + $0x68] sm:$0xff]
    %v191 = vld [vmem:[#allocation11 + $0x70] sm:$0xff]
    %v192 = vld [vmem:[#allocation11 + $0x78] sm:$0xff]
    %v193 = vld [vmem:[#allocation13] sm:$0xf]
    %v194 = vld [vmem:[#allocation13 + $0x4] sm:$0xf]
    %v195 = vld [vmem:[#allocation13 + $0x8] sm:$0xf]
    %v196 = vld [vmem:[#allocation13 + $0xc] sm:$0xf]
    %v197 = vld [vmem:[#allocation13 + $0x10] sm:$0xf]
    %v198 = vld [vmem:[#allocation13 + $0x14] sm:$0xf]
    %v199 = vld [vmem:[#allocation13 + $0x18] sm:$0xf]
    %v200 = vld [vmem:[#allocation13 + $0x1c] sm:$0xf]
    %v201 = vld [vmem:[#allocation13 + $0x20] sm:$0xf]
    %v202 = vld [vmem:[#allocation13 + $0x24] sm:$0xf]
    %v203 = vld [vmem:[#allocation13 + $0x28] sm:$0xf]
    %v204 = vld [vmem:[#allocation13 + $0x2c] sm:$0xf]
    %v205 = vld [vmem:[#allocation13 + $0x30] sm:$0xf]
    %v206 = vld [vmem:[#allocation13 + $0x34] sm:$0xf]
    %v207 = vld [vmem:[#allocation13 + $0x38] sm:$0xf]
    %v208 = vld [vmem:[#allocation13 + $0x3c] sm:$0xf]
    %v209 = vld [vmem:[%s7] sm:$0x1]
    %v210 = vld [vmem:[%s8] sm:$0x1]
    %v211 = vld [vmem:[#allocation8] sm:$0xf]
    %v212 = vld [vmem:[#allocation8 + $0x4] sm:$0xf]
    %v213 = vld [vmem:[#allocation8 + $0x8] sm:$0xf]
    %v214 = vld [vmem:[#allocation8 + $0xc] sm:$0xf]
    %v215 = vld [vmem:[#allocation8 + $0x10] sm:$0xf]
    %v216 = vld [vmem:[#allocation8 + $0x14] sm:$0xf]
    %v217 = vld [vmem:[#allocation8 + $0x18] sm:$0xf]
    %v218 = vld [vmem:[#allocation8 + $0x1c] sm:$0xf]
    %v219 = vld [vmem:[#allocation8 + $0x20] sm:$0xf]
    %v220 = vld [vmem:[#allocation8 + $0x24] sm:$0xf]
    %v221 = vld [vmem:[#allocation8 + $0x28] sm:$0xf]
    %v222 = vld [vmem:[#allocation8 + $0x2c] sm:$0xf]
    %v223 = vld [vmem:[#allocation8 + $0x30] sm:$0xf]
    %v224 = vld [vmem:[#allocation8 + $0x34] sm:$0xf]
    %v225 = vld [vmem:[#allocation8 + $0x38] sm:$0xf]
    %v226 = vld [vmem:[#allocation8 + $0x3c] sm:$0xf]
    %v243 = vunpack.c.l.b16 %v129
    %v244 = vunpack.c.l.b16 %v130
    %v245 = vunpack.c.l.b16 %v131
    %v246 = vunpack.c.l.b16 %v132
    %v247 = vunpack.c.l.b16 %v133
    %v248 = vunpack.c.l.b16 %v134
    %v249 = vunpack.c.l.b16 %v135
    %v250 = vunpack.c.l.b16 %v136
    %v251 = vunpack.c.l.b16 %v137
    %v252 = vunpack.c.l.b16 %v138
    %v253 = vunpack.c.l.b16 %v139
    %v254 = vunpack.c.l.b16 %v140
    %v255 = vunpack.c.l.b16 %v141
    %v256 = vunpack.c.l.b16 %v142
    %v257 = vunpack.c.l.b16 %v143
    %v258 = vunpack.c.l.b16 %v144
    %v259 = vpack.c.b16 %v244, %v243
    %v260 = vpack.c.b16 %v246, %v245
    %v261 = vpack.c.b16 %v248, %v247
    %v262 = vpack.c.b16 %v250, %v249
    %v263 = vpack.c.b16 %v252, %v251
    %v264 = vpack.c.b16 %v254, %v253
    %v265 = vpack.c.b16 %v256, %v255
    %v266 = vpack.c.b16 %v258, %v257
    %v291 = vunpack.c.l.b16 %v177
    %v292 = vunpack.c.h.b16 %v177
    %v293 = vunpack.c.l.b16 %v178
    %v294 = vunpack.c.h.b16 %v178
    %v295 = vunpack.c.l.b16 %v179
    %v296 = vunpack.c.h.b16 %v179
    %v297 = vunpack.c.l.b16 %v180
    %v298 = vunpack.c.h.b16 %v180
    %v299 = vunpack.c.l.b16 %v181
    %v300 = vunpack.c.h.b16 %v181
    %v301 = vunpack.c.l.b16 %v182
    %v302 = vunpack.c.h.b16 %v182
    %v303 = vunpack.c.l.b16 %v183
    %v304 = vunpack.c.h.b16 %v183
    %v305 = vunpack.c.l.b16 %v184
    %v306 = vunpack.c.h.b16 %v184
    %v307 = vunpack.c.l.b16 %v185
    %v308 = vunpack.c.h.b16 %v185
    %v309 = vunpack.c.l.b16 %v186
    %v310 = vunpack.c.h.b16 %v186
    %v311 = vunpack.c.l.b16 %v187
    %v312 = vunpack.c.h.b16 %v187
    %v313 = vunpack.c.l.b16 %v188
    %v314 = vunpack.c.h.b16 %v188
    %v315 = vunpack.c.l.b16 %v189
    %v316 = vunpack.c.h.b16 %v189
    %v317 = vunpack.c.l.b16 %v190
    %v318 = vunpack.c.h.b16 %v190
    %v319 = vunpack.c.l.b16 %v191
    %v320 = vunpack.c.h.b16 %v191
    %v321 = vunpack.c.l.b16 %v192
    %v322 = vunpack.c.h.b16 %v192
    %v323 = vpack.c.b16 %v293, %v291
    %v324 = vpack.c.b16 %v294, %v292
    %v325 = vpack.c.b16 %v297, %v295
    %v326 = vpack.c.b16 %v298, %v296
    %v327 = vpack.c.b16 %v301, %v299
    %v328 = vpack.c.b16 %v302, %v300
    %v329 = vpack.c.b16 %v305, %v303
    %v330 = vpack.c.b16 %v306, %v304
    %v331 = vpack.c.b16 %v309, %v307
    %v332 = vpack.c.b16 %v310, %v308
    %v333 = vpack.c.b16 %v313, %v311
    %v334 = vpack.c.b16 %v314, %v312
    %v335 = vpack.c.b16 %v317, %v315
    %v336 = vpack.c.b16 %v318, %v316
    %v337 = vpack.c.b16 %v321, %v319
    %v338 = vpack.c.b16 %v322, %v320
    %355 = vmatprep.subr.bf16.mxu0 %v324
    %356 = vmatpush1.bf16.msra.mxu0 %v323
    %357 = vmatprep.subr.bf16.mxu0 %v326
    %358 = vmatpush1.bf16.msra.mxu0 %v325
    %359 = vmatprep.subr.bf16.mxu0 %v328
    %360 = vmatpush1.bf16.msra.mxu0 %v327
    %361 = vmatprep.subr.bf16.mxu0 %v330
    %362 = vmatpush1.bf16.msra.mxu0 %v329
    %363 = vmatprep.subr.bf16.mxu0 %v332
    %364 = vmatpush1.bf16.msra.mxu0 %v331
    %365 = vmatprep.subr.bf16.mxu0 %v334
    %366 = vmatpush1.bf16.msra.mxu0 %v333
    %367 = vmatprep.subr.bf16.mxu0 %v336
    %368 = vmatpush1.bf16.msra.mxu0 %v335
    %369 = vmatprep.subr.bf16.mxu0 %v338
    %370 = vmatpush1.bf16.msra.mxu0 %v337
    %371 = vmatprep.subr.bf16.mxu0 0
    %372 = vmatpush1.bf16.msra.mxu0 0
    %373 = vmatprep.subr.bf16.mxu0 0
    %374 = vmatpush1.bf16.msra.mxu0 0
    %375 = vmatprep.subr.bf16.mxu0 0
    %376 = vmatpush1.bf16.msra.mxu0 0
    %377 = vmatprep.subr.bf16.mxu0 0
    %378 = vmatpush1.bf16.msra.mxu0 0
    %379 = vmatprep.subr.bf16.mxu0 0
    %380 = vmatpush1.bf16.msra.mxu0 0
    %381 = vmatprep.subr.bf16.mxu0 0
    %382 = vmatpush1.bf16.msra.mxu0 0
    %383 = vmatprep.subr.bf16.mxu0 0
    %384 = vmatpush1.bf16.msra.mxu0 0
    %385 = vmatprep.subr.bf16.mxu0 0
    %386 = vmatpush1.bf16.msra.mxu0 0
    %387 = vmatprep.mubr.bf16.mxu0 0
    %388 = vmatmul.mubr.bf16.gmra.mrb[0].mxu0 %v259
    %v389 = vpop.f32.mrb[0].mxu0
    %v390 = vadd.f32 0.0, %v389
    %v391 = vpop.f32.mrb[0].mxu0
    %v392 = vadd.f32 0.0, %v391
    %v393 = vpop.f32.mrb[0].mxu0
    %v394 = vadd.f32 0.0, %v393
    %v395 = vpop.f32.mrb[0].mxu0
    %v396 = vadd.f32 0.0, %v395
    %397 = vmatprep.mubr.bf16.mxu0 0
    %398 = vmatmul.mubr.bf16.gmra.mrb[0].mxu0 %v260
    %v399 = vpop.f32.mrb[0].mxu0
    %v400 = vadd.f32 0.0, %v399
    %v401 = vpop.f32.mrb[0].mxu0
    %v402 = vadd.f32 0.0, %v401
    %v403 = vpop.f32.mrb[0].mxu0
    %v404 = vadd.f32 0.0, %v403
    %v405 = vpop.f32.mrb[0].mxu0
    %v406 = vadd.f32 0.0, %v405
    %407 = vmatprep.mubr.bf16.mxu0 0
    %408 = vmatmul.mubr.bf16.gmra.mrb[0].mxu0 %v261
    %v409 = vpop.f32.mrb[0].mxu0
    %v410 = vadd.f32 0.0, %v409
    %v411 = vpop.f32.mrb[0].mxu0
    %v412 = vadd.f32 0.0, %v411
    %v413 = vpop.f32.mrb[0].mxu0
    %v414 = vadd.f32 0.0, %v413
    %v415 = vpop.f32.mrb[0].mxu0
    %v416 = vadd.f32 0.0, %v415
    %417 = vmatprep.mubr.bf16.mxu0 0
    %418 = vmatmul.mubr.bf16.gmra.mrb[0].mxu0 %v262
    %v419 = vpop.f32.mrb[0].mxu0
    %v420 = vadd.f32 0.0, %v419
    %v421 = vpop.f32.mrb[0].mxu0
    %v422 = vadd.f32 0.0, %v421
    %v423 = vpop.f32.mrb[0].mxu0
    %v424 = vadd.f32 0.0, %v423
    %v425 = vpop.f32.mrb[0].mxu0
    %v426 = vadd.f32 0.0, %v425
    %427 = vmatprep.mubr.bf16.mxu0 0
    %428 = vmatmul.mubr.bf16.gmra.mrb[0].mxu0 %v263
    %v429 = vpop.f32.mrb[0].mxu0
    %v430 = vadd.f32 0.0, %v429
    %v431 = vpop.f32.mrb[0].mxu0
    %v432 = vadd.f32 0.0, %v431
    %v433 = vpop.f32.mrb[0].mxu0
    %v434 = vadd.f32 0.0, %v433
    %v435 = vpop.f32.mrb[0].mxu0
    %v436 = vadd.f32 0.0, %v435
    %437 = vmatprep.mubr.bf16.mxu0 0
    %438 = vmatmul.mubr.bf16.gmra.mrb[0].mxu0 %v264
    %v439 = vpop.f32.mrb[0].mxu0
    %v440 = vadd.f32 0.0, %v439
    %v441 = vpop.f32.mrb[0].mxu0
    %v442 = vadd.f32 0.0, %v441
    %v443 = vpop.f32.mrb[0].mxu0
    %v444 = vadd.f32 0.0, %v443
    %v445 = vpop.f32.mrb[0].mxu0
    %v446 = vadd.f32 0.0, %v445
    %447 = vmatprep.mubr.bf16.mxu0 0
    %448 = vmatmul.mubr.bf16.gmra.mrb[0].mxu0 %v265
    %v449 = vpop.f32.mrb[0].mxu0
    %v450 = vadd.f32 0.0, %v449
    %v451 = vpop.f32.mrb[0].mxu0
    %v452 = vadd.f32 0.0, %v451
    %v453 = vpop.f32.mrb[0].mxu0
    %v454 = vadd.f32 0.0, %v453
    %v455 = vpop.f32.mrb[0].mxu0
    %v456 = vadd.f32 0.0, %v455
    %457 = vmatprep.mubr.bf16.mxu0 0
    %458 = vmatmul.mubr.bf16.gmra.mrb[0].mxu0 %v266
    %v459 = vpop.f32.mrb[0].mxu0
    %v460 = vadd.f32 0.0, %v459
    %v461 = vpop.f32.mrb[0].mxu0
    %v462 = vadd.f32 0.0, %v461
    %v463 = vpop.f32.mrb[0].mxu0
    %v464 = vadd.f32 0.0, %v463
    %v465 = vpop.f32.mrb[0].mxu0
    %v466 = vadd.f32 0.0, %v465
    %467 = vdwg.mxu0
    %v468 = vpack.c.bf16 %v394, %v390
    %v469 = vpack.c.bf16 %v404, %v400
    %v470 = vpack.c.bf16 %v414, %v410
    %v471 = vpack.c.bf16 %v424, %v420
    %v472 = vpack.c.bf16 %v434, %v430
    %v473 = vpack.c.bf16 %v444, %v440
    %v474 = vpack.c.bf16 %v454, %v450
    %v475 = vpack.c.bf16 %v464, %v460
    %v477 = vlaneseq
    %v478 = vshrl.u32 %v477, 7
    %v479 = vsub.s32 0, %v478
    %v480 = vrot.slane %v209, %v479
    %v498 = vunpack.c.l.b16 %v211
    %v499 = vunpack.c.l.b16 %v212
    %v500 = vunpack.c.l.b16 %v213
    %v501 = vunpack.c.l.b16 %v214
    %v502 = vunpack.c.l.b16 %v215
    %v503 = vunpack.c.l.b16 %v216
    %v504 = vunpack.c.l.b16 %v217
    %v505 = vunpack.c.l.b16 %v218
    %v506 = vunpack.c.l.b16 %v219
    %v507 = vunpack.c.l.b16 %v220
    %v508 = vunpack.c.l.b16 %v221
    %v509 = vunpack.c.l.b16 %v222
    %v510 = vunpack.c.l.b16 %v223
    %v511 = vunpack.c.l.b16 %v224
    %v512 = vunpack.c.l.b16 %v225
    %v513 = vunpack.c.l.b16 %v226
    %v514 = vpack.c.b16 %v499, %v498
    %v515 = vpack.c.b16 %v501, %v500
    %v516 = vpack.c.b16 %v503, %v502
    %v517 = vpack.c.b16 %v505, %v504
    %v518 = vpack.c.b16 %v507, %v506
    %v519 = vpack.c.b16 %v509, %v508
    %v520 = vpack.c.b16 %v511, %v510
    %v521 = vpack.c.b16 %v513, %v512
    %v546 = vunpack.c.l.b16 %v193
    %v547 = vunpack.c.l.b16 %v194
    %v548 = vunpack.c.l.b16 %v195
    %v549 = vunpack.c.l.b16 %v196
    %v550 = vunpack.c.l.b16 %v197
    %v551 = vunpack.c.l.b16 %v198
    %v552 = vunpack.c.l.b16 %v199
    %v553 = vunpack.c.l.b16 %v200
    %v554 = vunpack.c.l.b16 %v201
    %v555 = vunpack.c.l.b16 %v202
    %v556 = vunpack.c.l.b16 %v203
    %v557 = vunpack.c.l.b16 %v204
    %v558 = vunpack.c.l.b16 %v205
    %v559 = vunpack.c.l.b16 %v206
    %v560 = vunpack.c.l.b16 %v207
    %v561 = vunpack.c.l.b16 %v208
    %v562 = vpack.c.b16 %v547, %v546
    %v563 = vpack.c.b16 %v549, %v548
    %v564 = vpack.c.b16 %v551, %v550
    %v565 = vpack.c.b16 %v553, %v552
    %v566 = vpack.c.b16 %v555, %v554
    %v567 = vpack.c.b16 %v557, %v556
    %v568 = vpack.c.b16 %v559, %v558
    %v569 = vpack.c.b16 %v561, %v560
    %578 = vmatprep.subr.bf16.mxu0 0
    %579 = vmatpush1.bf16.msra.mxu0 %v562
    %580 = vmatprep.subr.bf16.mxu0 0
    %581 = vmatpush1.bf16.msra.mxu0 %v563
    %582 = vmatprep.subr.bf16.mxu0 0
    %583 = vmatpush1.bf16.msra.mxu0 %v564
    %584 = vmatprep.subr.bf16.mxu0 0
    %585 = vmatpush1.bf16.msra.mxu0 %v565
    %586 = vmatprep.subr.bf16.mxu0 0
    %587 = vmatpush1.bf16.msra.mxu0 %v566
    %588 = vmatprep.subr.bf16.mxu0 0
    %589 = vmatpush1.bf16.msra.mxu0 %v567
    %590 = vmatprep.subr.bf16.mxu0 0
    %591 = vmatpush1.bf16.msra.mxu0 %v568
    %592 = vmatprep.subr.bf16.mxu0 0
    %593 = vmatpush1.bf16.msra.mxu0 %v569
    %594 = vmatprep.subr.bf16.mxu0 0
    %595 = vmatpush1.bf16.msra.mxu0 0
    %596 = vmatprep.subr.bf16.mxu0 0
    %597 = vmatpush1.bf16.msra.mxu0 0
    %598 = vmatprep.subr.bf16.mxu0 0
    %599 = vmatpush1.bf16.msra.mxu0 0
    %600 = vmatprep.subr.bf16.mxu0 0
    %601 = vmatpush1.bf16.msra.mxu0 0
    %602 = vmatprep.subr.bf16.mxu0 0
    %603 = vmatpush1.bf16.msra.mxu0 0
    %604 = vmatprep.subr.bf16.mxu0 0
    %605 = vmatpush1.bf16.msra.mxu0 0
    %606 = vmatprep.subr.bf16.mxu0 0
    %607 = vmatpush1.bf16.msra.mxu0 0
    %608 = vmatprep.subr.bf16.mxu0 0
    %609 = vmatpush1.bf16.msra.mxu0 0
    %610 = vmatprep.mubr.bf16.mxu0 0
    %611 = vmatmul.mubr.bf16.gmra.mrb[0].mxu0 %v514
    %v612 = vpop.f32.mrb[0].mxu0
    %v613 = vadd.f32 %v480, %v612
    %v614 = vpop.f32.mrb[0].mxu0
    %v615 = vpop.f32.mrb[0].mxu0
    %v616 = vadd.f32 %v480, %v615
    %v617 = vpop.f32.mrb[0].mxu0
    %618 = vmatprep.mubr.bf16.mxu0 0
    %619 = vmatmul.mubr.bf16.gmra.mrb[0].mxu0 %v515
    %v620 = vpop.f32.mrb[0].mxu0
    %v621 = vadd.f32 %v480, %v620
    %v622 = vpop.f32.mrb[0].mxu0
    %v623 = vpop.f32.mrb[0].mxu0
    %v624 = vadd.f32 %v480, %v623
    %v625 = vpop.f32.mrb[0].mxu0
    %626 = vmatprep.mubr.bf16.mxu0 0
    %627 = vmatmul.mubr.bf16.gmra.mrb[0].mxu0 %v516
    %v628 = vpop.f32.mrb[0].mxu0
    %v629 = vadd.f32 %v480, %v628
    %v630 = vpop.f32.mrb[0].mxu0
    %v631 = vpop.f32.mrb[0].mxu0
    %v632 = vadd.f32 %v480, %v631
    %v633 = vpop.f32.mrb[0].mxu0
    %634 = vmatprep.mubr.bf16.mxu0 0
    %635 = vmatmul.mubr.bf16.gmra.mrb[0].mxu0 %v517
    %v636 = vpop.f32.mrb[0].mxu0
    %v637 = vadd.f32 %v480, %v636
    %v638 = vpop.f32.mrb[0].mxu0
    %v639 = vpop.f32.mrb[0].mxu0
    %v640 = vadd.f32 %v480, %v639
    %v641 = vpop.f32.mrb[0].mxu0
    %642 = vmatprep.mubr.bf16.mxu0 0
    %643 = vmatmul.mubr.bf16.gmra.mrb[0].mxu0 %v518
    %v644 = vpop.f32.mrb[0].mxu0
    %v645 = vadd.f32 %v480, %v644
    %v646 = vpop.f32.mrb[0].mxu0
    %v647 = vpop.f32.mrb[0].mxu0
    %v648 = vadd.f32 %v480, %v647
    %v649 = vpop.f32.mrb[0].mxu0
    %650 = vmatprep.mubr.bf16.mxu0 0
    %651 = vmatmul.mubr.bf16.gmra.mrb[0].mxu0 %v519
    %v652 = vpop.f32.mrb[0].mxu0
    %v653 = vadd.f32 %v480, %v652
    %v654 = vpop.f32.mrb[0].mxu0
    %v655 = vpop.f32.mrb[0].mxu0
    %v656 = vadd.f32 %v480, %v655
    %v657 = vpop.f32.mrb[0].mxu0
    %658 = vmatprep.mubr.bf16.mxu0 0
    %659 = vmatmul.mubr.bf16.gmra.mrb[0].mxu0 %v520
    %v660 = vpop.f32.mrb[0].mxu0
    %v661 = vadd.f32 %v480, %v660
    %v662 = vpop.f32.mrb[0].mxu0
    %v663 = vpop.f32.mrb[0].mxu0
    %v664 = vadd.f32 %v480, %v663
    %v665 = vpop.f32.mrb[0].mxu0
    %666 = vmatprep.mubr.bf16.mxu0 0
    %667 = vmatmul.mubr.bf16.gmra.mrb[0].mxu0 %v521
    %v668 = vpop.f32.mrb[0].mxu0
    %v669 = vadd.f32 %v480, %v668
    %v670 = vpop.f32.mrb[0].mxu0
    %v671 = vpop.f32.mrb[0].mxu0
    %v672 = vadd.f32 %v480, %v671
    %v673 = vpop.f32.mrb[0].mxu0
    %674 = vdwg.mxu0
    %v691 = vunpack.c.l.b16 %v145
    %v692 = vunpack.c.l.b16 %v146
    %v693 = vunpack.c.l.b16 %v147
    %v694 = vunpack.c.l.b16 %v148
    %v695 = vunpack.c.l.b16 %v149
    %v696 = vunpack.c.l.b16 %v150
    %v697 = vunpack.c.l.b16 %v151
    %v698 = vunpack.c.l.b16 %v152
    %v699 = vunpack.c.l.b16 %v153
    %v700 = vunpack.c.l.b16 %v154
    %v701 = vunpack.c.l.b16 %v155
    %v702 = vunpack.c.l.b16 %v156
    %v703 = vunpack.c.l.b16 %v157
    %v704 = vunpack.c.l.b16 %v158
    %v705 = vunpack.c.l.b16 %v159
    %v706 = vunpack.c.l.b16 %v160
    %v707 = vpack.c.b16 %v692, %v691
    %v708 = vpack.c.b16 %v694, %v693
    %v709 = vpack.c.b16 %v696, %v695
    %v710 = vpack.c.b16 %v698, %v697
    %v711 = vpack.c.b16 %v700, %v699
    %v712 = vpack.c.b16 %v702, %v701
    %v713 = vpack.c.b16 %v704, %v703
    %v714 = vpack.c.b16 %v706, %v705
    %723 = vmatprep.subr.bf16.mxu0 0
    %724 = vmatpush1.bf16.msra.mxu0 %v468
    %725 = vmatprep.subr.bf16.mxu0 0
    %726 = vmatpush1.bf16.msra.mxu0 %v469
    %727 = vmatprep.subr.bf16.mxu0 0
    %728 = vmatpush1.bf16.msra.mxu0 %v470
    %729 = vmatprep.subr.bf16.mxu0 0
    %730 = vmatpush1.bf16.msra.mxu0 %v471
    %731 = vmatprep.subr.bf16.mxu0 0
    %732 = vmatpush1.bf16.msra.mxu0 %v472
    %733 = vmatprep.subr.bf16.mxu0 0
    %734 = vmatpush1.bf16.msra.mxu0 %v473
    %735 = vmatprep.subr.bf16.mxu0 0
    %736 = vmatpush1.bf16.msra.mxu0 %v474
    %737 = vmatprep.subr.bf16.mxu0 0
    %738 = vmatpush1.bf16.msra.mxu0 %v475
    %739 = vmatprep.subr.bf16.mxu0 0
    %740 = vmatpush1.bf16.msra.mxu0 0
    %741 = vmatprep.subr.bf16.mxu0 0
    %742 = vmatpush1.bf16.msra.mxu0 0
    %743 = vmatprep.subr.bf16.mxu0 0
    %744 = vmatpush1.bf16.msra.mxu0 0
    %745 = vmatprep.subr.bf16.mxu0 0
    %746 = vmatpush1.bf16.msra.mxu0 0
    %747 = vmatprep.subr.bf16.mxu0 0
    %748 = vmatpush1.bf16.msra.mxu0 0
    %749 = vmatprep.subr.bf16.mxu0 0
    %750 = vmatpush1.bf16.msra.mxu0 0
    %751 = vmatprep.subr.bf16.mxu0 0
    %752 = vmatpush1.bf16.msra.mxu0 0
    %753 = vmatprep.subr.bf16.mxu0 0
    %754 = vmatpush1.bf16.msra.mxu0 0
    %755 = vmatprep.mubr.bf16.mxu0 0
    %756 = vmatmul.mubr.bf16.gmra.mrb[0].mxu0 %v707
    %v757 = vpop.f32.mrb[0].mxu0
    %v758 = vadd.f32 %v613, %v757
    %v759 = vpop.f32.mrb[0].mxu0
    %v760 = vpop.f32.mrb[0].mxu0
    %v761 = vadd.f32 %v616, %v760
    %v762 = vpop.f32.mrb[0].mxu0
    %763 = vmatprep.mubr.bf16.mxu0 0
    %764 = vmatmul.mubr.bf16.gmra.mrb[0].mxu0 %v708
    %v765 = vpop.f32.mrb[0].mxu0
    %v766 = vadd.f32 %v621, %v765
    %v767 = vpop.f32.mrb[0].mxu0
    %v768 = vpop.f32.mrb[0].mxu0
    %v769 = vadd.f32 %v624, %v768
    %v770 = vpop.f32.mrb[0].mxu0
    %771 = vmatprep.mubr.bf16.mxu0 0
    %772 = vmatmul.mubr.bf16.gmra.mrb[0].mxu0 %v709
    %v773 = vpop.f32.mrb[0].mxu0
    %v774 = vadd.f32 %v629, %v773
    %v775 = vpop.f32.mrb[0].mxu0
    %v776 = vpop.f32.mrb[0].mxu0
    %v777 = vadd.f32 %v632, %v776
    %v778 = vpop.f32.mrb[0].mxu0
    %779 = vmatprep.mubr.bf16.mxu0 0
    %780 = vmatmul.mubr.bf16.gmra.mrb[0].mxu0 %v710
    %v781 = vpop.f32.mrb[0].mxu0
    %v782 = vadd.f32 %v637, %v781
    %v783 = vpop.f32.mrb[0].mxu0
    %v784 = vpop.f32.mrb[0].mxu0
    %v785 = vadd.f32 %v640, %v784
    %v786 = vpop.f32.mrb[0].mxu0
    %787 = vmatprep.mubr.bf16.mxu0 0
    %788 = vmatmul.mubr.bf16.gmra.mrb[0].mxu0 %v711
    %v789 = vpop.f32.mrb[0].mxu0
    %v790 = vadd.f32 %v645, %v789
    %v791 = vpop.f32.mrb[0].mxu0
    %v792 = vpop.f32.mrb[0].mxu0
    %v793 = vadd.f32 %v648, %v792
    %v794 = vpop.f32.mrb[0].mxu0
    %795 = vmatprep.mubr.bf16.mxu0 0
    %796 = vmatmul.mubr.bf16.gmra.mrb[0].mxu0 %v712
    %v797 = vpop.f32.mrb[0].mxu0
    %v798 = vadd.f32 %v653, %v797
    %v799 = vpop.f32.mrb[0].mxu0
    %v800 = vpop.f32.mrb[0].mxu0
    %v801 = vadd.f32 %v656, %v800
    %v802 = vpop.f32.mrb[0].mxu0
    %803 = vmatprep.mubr.bf16.mxu0 0
    %804 = vmatmul.mubr.bf16.gmra.mrb[0].mxu0 %v713
    %v805 = vpop.f32.mrb[0].mxu0
    %v806 = vadd.f32 %v661, %v805
    %v807 = vpop.f32.mrb[0].mxu0
    %v808 = vpop.f32.mrb[0].mxu0
    %v809 = vadd.f32 %v664, %v808
    %v810 = vpop.f32.mrb[0].mxu0
    %811 = vmatprep.mubr.bf16.mxu0 0
    %812 = vmatmul.mubr.bf16.gmra.mrb[0].mxu0 %v714
    %v813 = vpop.f32.mrb[0].mxu0
    %v814 = vadd.f32 %v669, %v813
    %v815 = vpop.f32.mrb[0].mxu0
    %v816 = vpop.f32.mrb[0].mxu0
    %v817 = vadd.f32 %v672, %v816
    %v818 = vpop.f32.mrb[0].mxu0
    %819 = vdwg.mxu0
    %v820 = vmax.f32 %v758, 0.0
    %v821 = vmax.f32 %v761, 0.0
    %v822 = vmax.f32 %v766, 0.0
    %v823 = vmax.f32 %v769, 0.0
    %v824 = vmax.f32 %v774, 0.0
    %v825 = vmax.f32 %v777, 0.0
    %v826 = vmax.f32 %v782, 0.0
    %v827 = vmax.f32 %v785, 0.0
    %v828 = vmax.f32 %v790, 0.0
    %v829 = vmax.f32 %v793, 0.0
    %v830 = vmax.f32 %v798, 0.0
    %v831 = vmax.f32 %v801, 0.0
    %v832 = vmax.f32 %v806, 0.0
    %v833 = vmax.f32 %v809, 0.0
    %v834 = vmax.f32 %v814, 0.0
    %v835 = vmax.f32 %v817, 0.0
    %v836 = vpack.c.bf16 %v821, %v820
    %v837 = vpack.c.bf16 %v823, %v822
    %v838 = vpack.c.bf16 %v825, %v824
    %v839 = vpack.c.bf16 %v827, %v826
    %v840 = vpack.c.bf16 %v829, %v828
    %v841 = vpack.c.bf16 %v831, %v830
    %v842 = vpack.c.bf16 %v833, %v832
    %v843 = vpack.c.bf16 %v835, %v834
    %v860 = vunpack.c.l.b16 %v161
    %v861 = vunpack.c.l.b16 %v162
    %v862 = vunpack.c.l.b16 %v163
    %v863 = vunpack.c.l.b16 %v164
    %v864 = vunpack.c.l.b16 %v165
    %v865 = vunpack.c.l.b16 %v166
    %v866 = vunpack.c.l.b16 %v167
    %v867 = vunpack.c.l.b16 %v168
    %v868 = vunpack.c.l.b16 %v169
    %v869 = vunpack.c.l.b16 %v170
    %v870 = vunpack.c.l.b16 %v171
    %v871 = vunpack.c.l.b16 %v172
    %v872 = vunpack.c.l.b16 %v173
    %v873 = vunpack.c.l.b16 %v174
    %v874 = vunpack.c.l.b16 %v175
    %v875 = vunpack.c.l.b16 %v176
    %v876 = vpack.c.b16 %v861, %v860
    %v877 = vpack.c.b16 %v863, %v862
    %v878 = vpack.c.b16 %v865, %v864
    %v879 = vpack.c.b16 %v867, %v866
    %v880 = vpack.c.b16 %v869, %v868
    %v881 = vpack.c.b16 %v871, %v870
    %v882 = vpack.c.b16 %v873, %v872
    %v883 = vpack.c.b16 %v875, %v874
    %892 = vmatprep.subr.bf16.mxu0 0
    %893 = vmatpush1.bf16.msra.mxu0 %v836
    %894 = vmatprep.subr.bf16.mxu0 0
    %895 = vmatpush1.bf16.msra.mxu0 %v837
    %896 = vmatprep.subr.bf16.mxu0 0
    %897 = vmatpush1.bf16.msra.mxu0 %v838
    %898 = vmatprep.subr.bf16.mxu0 0
    %899 = vmatpush1.bf16.msra.mxu0 %v839
    %900 = vmatprep.subr.bf16.mxu0 0
    %901 = vmatpush1.bf16.msra.mxu0 %v840
    %902 = vmatprep.subr.bf16.mxu0 0
    %903 = vmatpush1.bf16.msra.mxu0 %v841
    %904 = vmatprep.subr.bf16.mxu0 0
    %905 = vmatpush1.bf16.msra.mxu0 %v842
    %906 = vmatprep.subr.bf16.mxu0 0
    %907 = vmatpush1.bf16.msra.mxu0 %v843
    %908 = vmatprep.subr.bf16.mxu0 0
    %909 = vmatpush1.bf16.msra.mxu0 0
    %910 = vmatprep.subr.bf16.mxu0 0
    %911 = vmatpush1.bf16.msra.mxu0 0
    %912 = vmatprep.subr.bf16.mxu0 0
    %913 = vmatpush1.bf16.msra.mxu0 0
    %914 = vmatprep.subr.bf16.mxu0 0
    %915 = vmatpush1.bf16.msra.mxu0 0
    %916 = vmatprep.subr.bf16.mxu0 0
    %917 = vmatpush1.bf16.msra.mxu0 0
    %918 = vmatprep.subr.bf16.mxu0 0
    %919 = vmatpush1.bf16.msra.mxu0 0
    %920 = vmatprep.subr.bf16.mxu0 0
    %921 = vmatpush1.bf16.msra.mxu0 0
    %922 = vmatprep.subr.bf16.mxu0 0
    %923 = vmatpush1.bf16.msra.mxu0 0
    %924 = vmatprep.mubr.bf16.mxu0 0
    %925 = vmatmul.mubr.bf16.gmra.mrb[0].mxu0 %v876
    %v926 = vpop.f32.mrb[0].mxu0
    %v927 = vadd.f32 0.0, %v926
    %v928 = vpop.f32.mrb[0].mxu0
    %v929 = vpop.f32.mrb[0].mxu0
    %v930 = vadd.f32 0.0, %v929
    %v931 = vpop.f32.mrb[0].mxu0
    %932 = vmatprep.mubr.bf16.mxu0 0
    %933 = vmatmul.mubr.bf16.gmra.mrb[0].mxu0 %v877
    %v934 = vpop.f32.mrb[0].mxu0
    %v935 = vadd.f32 0.0, %v934
    %v936 = vpop.f32.mrb[0].mxu0
    %v937 = vpop.f32.mrb[0].mxu0
    %v938 = vadd.f32 0.0, %v937
    %v939 = vpop.f32.mrb[0].mxu0
    %940 = vmatprep.mubr.bf16.mxu0 0
    %941 = vmatmul.mubr.bf16.gmra.mrb[0].mxu0 %v878
    %v942 = vpop.f32.mrb[0].mxu0
    %v943 = vadd.f32 0.0, %v942
    %v944 = vpop.f32.mrb[0].mxu0
    %v945 = vpop.f32.mrb[0].mxu0
    %v946 = vadd.f32 0.0, %v945
    %v947 = vpop.f32.mrb[0].mxu0
    %948 = vmatprep.mubr.bf16.mxu0 0
    %949 = vmatmul.mubr.bf16.gmra.mrb[0].mxu0 %v879
    %v950 = vpop.f32.mrb[0].mxu0
    %v951 = vadd.f32 0.0, %v950
    %v952 = vpop.f32.mrb[0].mxu0
    %v953 = vpop.f32.mrb[0].mxu0
    %v954 = vadd.f32 0.0, %v953
    %v955 = vpop.f32.mrb[0].mxu0
    %956 = vmatprep.mubr.bf16.mxu0 0
    %957 = vmatmul.mubr.bf16.gmra.mrb[0].mxu0 %v880
    %v958 = vpop.f32.mrb[0].mxu0
    %v959 = vadd.f32 0.0, %v958
    %v960 = vpop.f32.mrb[0].mxu0
    %v961 = vpop.f32.mrb[0].mxu0
    %v962 = vadd.f32 0.0, %v961
    %v963 = vpop.f32.mrb[0].mxu0
    %964 = vmatprep.mubr.bf16.mxu0 0
    %965 = vmatmul.mubr.bf16.gmra.mrb[0].mxu0 %v881
    %v966 = vpop.f32.mrb[0].mxu0
    %v967 = vadd.f32 0.0, %v966
    %v968 = vpop.f32.mrb[0].mxu0
    %v969 = vpop.f32.mrb[0].mxu0
    %v970 = vadd.f32 0.0, %v969
    %v971 = vpop.f32.mrb[0].mxu0
    %972 = vmatprep.mubr.bf16.mxu0 0
    %973 = vmatmul.mubr.bf16.gmra.mrb[0].mxu0 %v882
    %v974 = vpop.f32.mrb[0].mxu0
    %v975 = vadd.f32 0.0, %v974
    %v976 = vpop.f32.mrb[0].mxu0
    %v977 = vpop.f32.mrb[0].mxu0
    %v978 = vadd.f32 0.0, %v977
    %v979 = vpop.f32.mrb[0].mxu0
    %980 = vmatprep.mubr.bf16.mxu0 0
    %981 = vmatmul.mubr.bf16.gmra.mrb[0].mxu0 %v883
    %v982 = vpop.f32.mrb[0].mxu0
    %v983 = vadd.f32 0.0, %v982
    %v984 = vpop.f32.mrb[0].mxu0
    %v985 = vpop.f32.mrb[0].mxu0
    %v986 = vadd.f32 0.0, %v985
    %v987 = vpop.f32.mrb[0].mxu0
    %988 = vdwg.mxu0
    %v990 = vlaneseq
    %v991 = vshrl.u32 %v990, 7
    %v992 = vsub.s32 0, %v991
    %v993 = vrot.slane %v210, %v992
    %v995 = vadd.f32 %v392, %v993
    %v996 = vadd.f32 %v396, %v993
    %v997 = vadd.f32 %v402, %v993
    %v998 = vadd.f32 %v406, %v993
    %v999 = vadd.f32 %v412, %v993
    %v1000 = vadd.f32 %v416, %v993
    %v1001 = vadd.f32 %v422, %v993
    %v1002 = vadd.f32 %v426, %v993
    %v1003 = vadd.f32 %v432, %v993
    %v1004 = vadd.f32 %v436, %v993
    %v1005 = vadd.f32 %v442, %v993
    %v1006 = vadd.f32 %v446, %v993
    %v1007 = vadd.f32 %v452, %v993
    %v1008 = vadd.f32 %v456, %v993
    %v1009 = vadd.f32 %v462, %v993
    %v1010 = vadd.f32 %v466, %v993
    %v1011 = vadd.f32 %v995, %v927
    %v1012 = vadd.f32 %v996, %v930
    %v1013 = vadd.f32 %v997, %v935
    %v1014 = vadd.f32 %v998, %v938
    %v1015 = vadd.f32 %v999, %v943
    %v1016 = vadd.f32 %v1000, %v946
    %v1017 = vadd.f32 %v1001, %v951
    %v1018 = vadd.f32 %v1002, %v954
    %v1019 = vadd.f32 %v1003, %v959
    %v1020 = vadd.f32 %v1004, %v962
    %v1021 = vadd.f32 %v1005, %v967
    %v1022 = vadd.f32 %v1006, %v970
    %v1023 = vadd.f32 %v1007, %v975
    %v1024 = vadd.f32 %v1008, %v978
    %v1025 = vadd.f32 %v1009, %v983
    %v1026 = vadd.f32 %v1010, %v986
    %v1027 = vmax.f32 %v1011, 0.0
    %v1028 = vmax.f32 %v1012, 0.0
    %v1029 = vmax.f32 %v1013, 0.0
    %v1030 = vmax.f32 %v1014, 0.0
    %v1031 = vmax.f32 %v1015, 0.0
    %v1032 = vmax.f32 %v1016, 0.0
    %v1033 = vmax.f32 %v1017, 0.0
    %v1034 = vmax.f32 %v1018, 0.0
    %v1035 = vmax.f32 %v1019, 0.0
    %v1036 = vmax.f32 %v1020, 0.0
    %v1037 = vmax.f32 %v1021, 0.0
    %v1038 = vmax.f32 %v1022, 0.0
    %v1039 = vmax.f32 %v1023, 0.0
    %v1040 = vmax.f32 %v1024, 0.0
    %v1041 = vmax.f32 %v1025, 0.0
    %v1042 = vmax.f32 %v1026, 0.0
    %v1043 = vpack.c.bf16 %v1028, %v1027
    %v1044 = vpack.c.bf16 %v1030, %v1029
    %v1045 = vpack.c.bf16 %v1032, %v1031
    %v1046 = vpack.c.bf16 %v1034, %v1033
    %v1047 = vpack.c.bf16 %v1036, %v1035
    %v1048 = vpack.c.bf16 %v1038, %v1037
    %v1049 = vpack.c.bf16 %v1040, %v1039
    %v1050 = vpack.c.bf16 %v1042, %v1041
    %s1051 = scalar_lea.vmem [#allocation11], 128
    %v1052 = vld [vmem:[%s1051] sm:$0xff]
    %v1053 = vld [vmem:[%s1051 + $0x8] sm:$0xff]
    %v1054 = vld [vmem:[%s1051 + $0x10] sm:$0xff]
    %v1055 = vld [vmem:[%s1051 + $0x18] sm:$0xff]
    %v1056 = vld [vmem:[%s1051 + $0x20] sm:$0xff]
    %v1057 = vld [vmem:[%s1051 + $0x28] sm:$0xff]
    %v1058 = vld [vmem:[%s1051 + $0x30] sm:$0xff]
    %v1059 = vld [vmem:[%s1051 + $0x38] sm:$0xff]
    %v1060 = vld [vmem:[%s1051 + $0x40] sm:$0xff]
    %v1061 = vld [vmem:[%s1051 + $0x48] sm:$0xff]
    %v1062 = vld [vmem:[%s1051 + $0x50] sm:$0xff]
    %v1063 = vld [vmem:[%s1051 + $0x58] sm:$0xff]
    %v1064 = vld [vmem:[%s1051 + $0x60] sm:$0xff]
    %v1065 = vld [vmem:[%s1051 + $0x68] sm:$0xff]
    %v1066 = vld [vmem:[%s1051 + $0x70] sm:$0xff]
    %v1067 = vld [vmem:[%s1051 + $0x78] sm:$0xff]
    %s1068 = scalar_lea.vmem [#allocation13], 64
    %v1069 = vld [vmem:[%s1068] sm:$0xf]
    %v1070 = vld [vmem:[%s1068 + $0x4] sm:$0xf]
    %v1071 = vld [vmem:[%s1068 + $0x8] sm:$0xf]
    %v1072 = vld [vmem:[%s1068 + $0xc] sm:$0xf]
    %v1073 = vld [vmem:[%s1068 + $0x10] sm:$0xf]
    %v1074 = vld [vmem:[%s1068 + $0x14] sm:$0xf]
    %v1075 = vld [vmem:[%s1068 + $0x18] sm:$0xf]
    %v1076 = vld [vmem:[%s1068 + $0x1c] sm:$0xf]
    %v1077 = vld [vmem:[%s1068 + $0x20] sm:$0xf]
    %v1078 = vld [vmem:[%s1068 + $0x24] sm:$0xf]
    %v1079 = vld [vmem:[%s1068 + $0x28] sm:$0xf]
    %v1080 = vld [vmem:[%s1068 + $0x2c] sm:$0xf]
    %v1081 = vld [vmem:[%s1068 + $0x30] sm:$0xf]
    %v1082 = vld [vmem:[%s1068 + $0x34] sm:$0xf]
    %v1083 = vld [vmem:[%s1068 + $0x38] sm:$0xf]
    %v1084 = vld [vmem:[%s1068 + $0x3c] sm:$0xf]
    %s1085 = scalar_lea.vmem %s7, 1
    %v1086 = vld [vmem:[%s1085] sm:$0x1]
    %s1087 = scalar_lea.vmem %s8, 1
    %v1088 = vld [vmem:[%s1087] sm:$0x1]
    %v1089 = vld [vmem:[#allocation10] sm:$0xf]
    %v1090 = vld [vmem:[#allocation10 + $0x4] sm:$0xf]
    %v1091 = vld [vmem:[#allocation10 + $0x8] sm:$0xf]
    %v1092 = vld [vmem:[#allocation10 + $0xc] sm:$0xf]
    %v1093 = vld [vmem:[#allocation10 + $0x10] sm:$0xf]
    %v1094 = vld [vmem:[#allocation10 + $0x14] sm:$0xf]
    %v1095 = vld [vmem:[#allocation10 + $0x18] sm:$0xf]
    %v1096 = vld [vmem:[#allocation10 + $0x1c] sm:$0xf]
    %v1097 = vld [vmem:[#allocation10 + $0x20] sm:$0xf]
    %v1098 = vld [vmem:[#allocation10 + $0x24] sm:$0xf]
    %v1099 = vld [vmem:[#allocation10 + $0x28] sm:$0xf]
    %v1100 = vld [vmem:[#allocation10 + $0x2c] sm:$0xf]
    %v1101 = vld [vmem:[#allocation10 + $0x30] sm:$0xf]
    %v1102 = vld [vmem:[#allocation10 + $0x34] sm:$0xf]
    %v1103 = vld [vmem:[#allocation10 + $0x38] sm:$0xf]
    %v1104 = vld [vmem:[#allocation10 + $0x3c] sm:$0xf]
    %v1121 = vunpack.c.l.b16 %v1052
    %v1122 = vunpack.c.h.b16 %v1052
    %v1123 = vunpack.c.l.b16 %v1053
    %v1124 = vunpack.c.h.b16 %v1053
    %v1125 = vunpack.c.l.b16 %v1054
    %v1126 = vunpack.c.h.b16 %v1054
    %v1127 = vunpack.c.l.b16 %v1055
    %v1128 = vunpack.c.h.b16 %v1055
    %v1129 = vunpack.c.l.b16 %v1056
    %v1130 = vunpack.c.h.b16 %v1056
    %v1131 = vunpack.c.l.b16 %v1057
    %v1132 = vunpack.c.h.b16 %v1057
    %v1133 = vunpack.c.l.b16 %v1058
    %v1134 = vunpack.c.h.b16 %v1058
    %v1135 = vunpack.c.l.b16 %v1059
    %v1136 = vunpack.c.h.b16 %v1059
    %v1137 = vunpack.c.l.b16 %v1060
    %v1138 = vunpack.c.h.b16 %v1060
    %v1139 = vunpack.c.l.b16 %v1061
    %v1140 = vunpack.c.h.b16 %v1061
    %v1141 = vunpack.c.l.b16 %v1062
    %v1142 = vunpack.c.h.b16 %v1062
    %v1143 = vunpack.c.l.b16 %v1063
    %v1144 = vunpack.c.h.b16 %v1063
    %v1145 = vunpack.c.l.b16 %v1064
    %v1146 = vunpack.c.h.b16 %v1064
    %v1147 = vunpack.c.l.b16 %v1065
    %v1148 = vunpack.c.h.b16 %v1065
    %v1149 = vunpack.c.l.b16 %v1066
    %v1150 = vunpack.c.h.b16 %v1066
    %v1151 = vunpack.c.l.b16 %v1067
    %v1152 = vunpack.c.h.b16 %v1067
    %v1153 = vpack.c.b16 %v1123, %v1121
    %v1154 = vpack.c.b16 %v1124, %v1122
    %v1155 = vpack.c.b16 %v1127, %v1125
    %v1156 = vpack.c.b16 %v1128, %v1126
    %v1157 = vpack.c.b16 %v1131, %v1129
    %v1158 = vpack.c.b16 %v1132, %v1130
    %v1159 = vpack.c.b16 %v1135, %v1133
    %v1160 = vpack.c.b16 %v1136, %v1134
    %v1161 = vpack.c.b16 %v1139, %v1137
    %v1162 = vpack.c.b16 %v1140, %v1138
    %v1163 = vpack.c.b16 %v1143, %v1141
    %v1164 = vpack.c.b16 %v1144, %v1142
    %v1165 = vpack.c.b16 %v1147, %v1145
    %v1166 = vpack.c.b16 %v1148, %v1146
    %v1167 = vpack.c.b16 %v1151, %v1149
    %v1168 = vpack.c.b16 %v1152, %v1150
    %1185 = vmatprep.subr.bf16.mxu0 %v1154
    %1186 = vmatpush1.bf16.msra.mxu0 %v1153
    %1187 = vmatprep.subr.bf16.mxu0 %v1156
    %1188 = vmatpush1.bf16.msra.mxu0 %v1155
    %1189 = vmatprep.subr.bf16.mxu0 %v1158
    %1190 = vmatpush1.bf16.msra.mxu0 %v1157
    %1191 = vmatprep.subr.bf16.mxu0 %v1160
    %1192 = vmatpush1.bf16.msra.mxu0 %v1159
    %1193 = vmatprep.subr.bf16.mxu0 %v1162
    %1194 = vmatpush1.bf16.msra.mxu0 %v1161
    %1195 = vmatprep.subr.bf16.mxu0 %v1164
    %1196 = vmatpush1.bf16.msra.mxu0 %v1163
    %1197 = vmatprep.subr.bf16.mxu0 %v1166
    %1198 = vmatpush1.bf16.msra.mxu0 %v1165
    %1199 = vmatprep.subr.bf16.mxu0 %v1168
    %1200 = vmatpush1.bf16.msra.mxu0 %v1167
    %1201 = vmatprep.subr.bf16.mxu0 0
    %1202 = vmatpush1.bf16.msra.mxu0 0
    %1203 = vmatprep.subr.bf16.mxu0 0
    %1204 = vmatpush1.bf16.msra.mxu0 0
    %1205 = vmatprep.subr.bf16.mxu0 0
    %1206 = vmatpush1.bf16.msra.mxu0 0
    %1207 = vmatprep.subr.bf16.mxu0 0
    %1208 = vmatpush1.bf16.msra.mxu0 0
    %1209 = vmatprep.subr.bf16.mxu0 0
    %1210 = vmatpush1.bf16.msra.mxu0 0
    %1211 = vmatprep.subr.bf16.mxu0 0
    %1212 = vmatpush1.bf16.msra.mxu0 0
    %1213 = vmatprep.subr.bf16.mxu0 0
    %1214 = vmatpush1.bf16.msra.mxu0 0
    %1215 = vmatprep.subr.bf16.mxu0 0
    %1216 = vmatpush1.bf16.msra.mxu0 0
    %1217 = vmatprep.mubr.bf16.mxu0 0
    %1218 = vmatmul.mubr.bf16.gmra.mrb[0].mxu0 %v1043
    %v1219 = vpop.f32.mrb[0].mxu0
    %v1220 = vadd.f32 0.0, %v1219
    %v1221 = vpop.f32.mrb[0].mxu0
    %v1222 = vadd.f32 0.0, %v1221
    %v1223 = vpop.f32.mrb[0].mxu0
    %v1224 = vadd.f32 0.0, %v1223
    %v1225 = vpop.f32.mrb[0].mxu0
    %v1226 = vadd.f32 0.0, %v1225
    %1227 = vmatprep.mubr.bf16.mxu0 0
    %1228 = vmatmul.mubr.bf16.gmra.mrb[0].mxu0 %v1044
    %v1229 = vpop.f32.mrb[0].mxu0
    %v1230 = vadd.f32 0.0, %v1229
    %v1231 = vpop.f32.mrb[0].mxu0
    %v1232 = vadd.f32 0.0, %v1231
    %v1233 = vpop.f32.mrb[0].mxu0
    %v1234 = vadd.f32 0.0, %v1233
    %v1235 = vpop.f32.mrb[0].mxu0
    %v1236 = vadd.f32 0.0, %v1235
    %1237 = vmatprep.mubr.bf16.mxu0 0
    %1238 = vmatmul.mubr.bf16.gmra.mrb[0].mxu0 %v1045
    %v1239 = vpop.f32.mrb[0].mxu0
    %v1240 = vadd.f32 0.0, %v1239
    %v1241 = vpop.f32.mrb[0].mxu0
    %v1242 = vadd.f32 0.0, %v1241
    %v1243 = vpop.f32.mrb[0].mxu0
    %v1244 = vadd.f32 0.0, %v1243
    %v1245 = vpop.f32.mrb[0].mxu0
    %v1246 = vadd.f32 0.0, %v1245
    %1247 = vmatprep.mubr.bf16.mxu0 0
    %1248 = vmatmul.mubr.bf16.gmra.mrb[0].mxu0 %v1046
    %v1249 = vpop.f32.mrb[0].mxu0
    %v1250 = vadd.f32 0.0, %v1249
    %v1251 = vpop.f32.mrb[0].mxu0
    %v1252 = vadd.f32 0.0, %v1251
    %v1253 = vpop.f32.mrb[0].mxu0
    %v1254 = vadd.f32 0.0, %v1253
    %v1255 = vpop.f32.mrb[0].mxu0
    %v1256 = vadd.f32 0.0, %v1255
    %1257 = vmatprep.mubr.bf16.mxu0 0
    %1258 = vmatmul.mubr.bf16.gmra.mrb[0].mxu0 %v1047
    %v1259 = vpop.f32.mrb[0].mxu0
    %v1260 = vadd.f32 0.0, %v1259
    %v1261 = vpop.f32.mrb[0].mxu0
    %v1262 = vadd.f32 0.0, %v1261
    %v1263 = vpop.f32.mrb[0].mxu0
    %v1264 = vadd.f32 0.0, %v1263
    %v1265 = vpop.f32.mrb[0].mxu0
    %v1266 = vadd.f32 0.0, %v1265
    %1267 = vmatprep.mubr.bf16.mxu0 0
    %1268 = vmatmul.mubr.bf16.gmra.mrb[0].mxu0 %v1048
    %v1269 = vpop.f32.mrb[0].mxu0
    %v1270 = vadd.f32 0.0, %v1269
    %v1271 = vpop.f32.mrb[0].mxu0
    %v1272 = vadd.f32 0.0, %v1271
    %v1273 = vpop.f32.mrb[0].mxu0
    %v1274 = vadd.f32 0.0, %v1273
    %v1275 = vpop.f32.mrb[0].mxu0
    %v1276 = vadd.f32 0.0, %v1275
    %1277 = vmatprep.mubr.bf16.mxu0 0
    %1278 = vmatmul.mubr.bf16.gmra.mrb[0].mxu0 %v1049
    %v1279 = vpop.f32.mrb[0].mxu0
    %v1280 = vadd.f32 0.0, %v1279
    %v1281 = vpop.f32.mrb[0].mxu0
    %v1282 = vadd.f32 0.0, %v1281
    %v1283 = vpop.f32.mrb[0].mxu0
    %v1284 = vadd.f32 0.0, %v1283
    %v1285 = vpop.f32.mrb[0].mxu0
    %v1286 = vadd.f32 0.0, %v1285
    %1287 = vmatprep.mubr.bf16.mxu0 0
    %1288 = vmatmul.mubr.bf16.gmra.mrb[0].mxu0 %v1050
    %v1289 = vpop.f32.mrb[0].mxu0
    %v1290 = vadd.f32 0.0, %v1289
    %v1291 = vpop.f32.mrb[0].mxu0
    %v1292 = vadd.f32 0.0, %v1291
    %v1293 = vpop.f32.mrb[0].mxu0
    %v1294 = vadd.f32 0.0, %v1293
    %v1295 = vpop.f32.mrb[0].mxu0
    %v1296 = vadd.f32 0.0, %v1295
    %1297 = vdwg.mxu0
    %v1298 = vpack.c.bf16 %v1224, %v1220
    %v1299 = vpack.c.bf16 %v1234, %v1230
    %v1300 = vpack.c.bf16 %v1244, %v1240
    %v1301 = vpack.c.bf16 %v1254, %v1250
    %v1302 = vpack.c.bf16 %v1264, %v1260
    %v1303 = vpack.c.bf16 %v1274, %v1270
    %v1304 = vpack.c.bf16 %v1284, %v1280
    %v1305 = vpack.c.bf16 %v1294, %v1290
    %v1307 = vlaneseq
    %v1308 = vshrl.u32 %v1307, 7
    %v1309 = vsub.s32 0, %v1308
    %v1310 = vrot.slane %v1086, %v1309
    %v1328 = vunpack.c.l.b16 %v1089
    %v1329 = vunpack.c.l.b16 %v1090
    %v1330 = vunpack.c.l.b16 %v1091
    %v1331 = vunpack.c.l.b16 %v1092
    %v1332 = vunpack.c.l.b16 %v1093
    %v1333 = vunpack.c.l.b16 %v1094
    %v1334 = vunpack.c.l.b16 %v1095
    %v1335 = vunpack.c.l.b16 %v1096
    %v1336 = vunpack.c.l.b16 %v1097
    %v1337 = vunpack.c.l.b16 %v1098
    %v1338 = vunpack.c.l.b16 %v1099
    %v1339 = vunpack.c.l.b16 %v1100
    %v1340 = vunpack.c.l.b16 %v1101
    %v1341 = vunpack.c.l.b16 %v1102
    %v1342 = vunpack.c.l.b16 %v1103
    %v1343 = vunpack.c.l.b16 %v1104
    %v1344 = vpack.c.b16 %v1329, %v1328
    %v1345 = vpack.c.b16 %v1331, %v1330
    %v1346 = vpack.c.b16 %v1333, %v1332
    %v1347 = vpack.c.b16 %v1335, %v1334
    %v1348 = vpack.c.b16 %v1337, %v1336
    %v1349 = vpack.c.b16 %v1339, %v1338
    %v1350 = vpack.c.b16 %v1341, %v1340
    %v1351 = vpack.c.b16 %v1343, %v1342
    %v1376 = vunpack.c.l.b16 %v1069
    %v1377 = vunpack.c.l.b16 %v1070
    %v1378 = vunpack.c.l.b16 %v1071
    %v1379 = vunpack.c.l.b16 %v1072
    %v1380 = vunpack.c.l.b16 %v1073
    %v1381 = vunpack.c.l.b16 %v1074
    %v1382 = vunpack.c.l.b16 %v1075
    %v1383 = vunpack.c.l.b16 %v1076
    %v1384 = vunpack.c.l.b16 %v1077
    %v1385 = vunpack.c.l.b16 %v1078
    %v1386 = vunpack.c.l.b16 %v1079
    %v1387 = vunpack.c.l.b16 %v1080
    %v1388 = vunpack.c.l.b16 %v1081
    %v1389 = vunpack.c.l.b16 %v1082
    %v1390 = vunpack.c.l.b16 %v1083
    %v1391 = vunpack.c.l.b16 %v1084
    %v1392 = vpack.c.b16 %v1377, %v1376
    %v1393 = vpack.c.b16 %v1379, %v1378
    %v1394 = vpack.c.b16 %v1381, %v1380
    %v1395 = vpack.c.b16 %v1383, %v1382
    %v1396 = vpack.c.b16 %v1385, %v1384
    %v1397 = vpack.c.b16 %v1387, %v1386
    %v1398 = vpack.c.b16 %v1389, %v1388
    %v1399 = vpack.c.b16 %v1391, %v1390
    %1408 = vmatprep.subr.bf16.mxu0 0
    %1409 = vmatpush1.bf16.msra.mxu0 %v1392
    %1410 = vmatprep.subr.bf16.mxu0 0
    %1411 = vmatpush1.bf16.msra.mxu0 %v1393
    %1412 = vmatprep.subr.bf16.mxu0 0
    %1413 = vmatpush1.bf16.msra.mxu0 %v1394
    %1414 = vmatprep.subr.bf16.mxu0 0
    %1415 = vmatpush1.bf16.msra.mxu0 %v1395
    %1416 = vmatprep.subr.bf16.mxu0 0
    %1417 = vmatpush1.bf16.msra.mxu0 %v1396
    %1418 = vmatprep.subr.bf16.mxu0 0
    %1419 = vmatpush1.bf16.msra.mxu0 %v1397
    %1420 = vmatprep.subr.bf16.mxu0 0
    %1421 = vmatpush1.bf16.msra.mxu0 %v1398
    %1422 = vmatprep.subr.bf16.mxu0 0
    %1423 = vmatpush1.bf16.msra.mxu0 %v1399
    %1424 = vmatprep.subr.bf16.mxu0 0
    %1425 = vmatpush1.bf16.msra.mxu0 0
    %1426 = vmatprep.subr.bf16.mxu0 0
    %1427 = vmatpush1.bf16.msra.mxu0 0
    %1428 = vmatprep.subr.bf16.mxu0 0
    %1429 = vmatpush1.bf16.msra.mxu0 0
    %1430 = vmatprep.subr.bf16.mxu0 0
    %1431 = vmatpush1.bf16.msra.mxu0 0
    %1432 = vmatprep.subr.bf16.mxu0 0
    %1433 = vmatpush1.bf16.msra.mxu0 0
    %1434 = vmatprep.subr.bf16.mxu0 0
    %1435 = vmatpush1.bf16.msra.mxu0 0
    %1436 = vmatprep.subr.bf16.mxu0 0
    %1437 = vmatpush1.bf16.msra.mxu0 0
    %1438 = vmatprep.subr.bf16.mxu0 0
    %1439 = vmatpush1.bf16.msra.mxu0 0
    %1440 = vmatprep.mubr.bf16.mxu0 0
    %1441 = vmatmul.mubr.bf16.gmra.mrb[0].mxu0 %v1344
    %v1442 = vpop.f32.mrb[0].mxu0
    %v1443 = vadd.f32 %v1310, %v1442
    %v1444 = vpop.f32.mrb[0].mxu0
    %v1445 = vpop.f32.mrb[0].mxu0
    %v1446 = vadd.f32 %v1310, %v1445
    %v1447 = vpop.f32.mrb[0].mxu0
    %1448 = vmatprep.mubr.bf16.mxu0 0
    %1449 = vmatmul.mubr.bf16.gmra.mrb[0].mxu0 %v1345
    %v1450 = vpop.f32.mrb[0].mxu0
    %v1451 = vadd.f32 %v1310, %v1450
    %v1452 = vpop.f32.mrb[0].mxu0
    %v1453 = vpop.f32.mrb[0].mxu0
    %v1454 = vadd.f32 %v1310, %v1453
    %v1455 = vpop.f32.mrb[0].mxu0
    %1456 = vmatprep.mubr.bf16.mxu0 0
    %1457 = vmatmul.mubr.bf16.gmra.mrb[0].mxu0 %v1346
    %v1458 = vpop.f32.mrb[0].mxu0
    %v1459 = vadd.f32 %v1310, %v1458
    %v1460 = vpop.f32.mrb[0].mxu0
    %v1461 = vpop.f32.mrb[0].mxu0
    %v1462 = vadd.f32 %v1310, %v1461
    %v1463 = vpop.f32.mrb[0].mxu0
    %1464 = vmatprep.mubr.bf16.mxu0 0
    %1465 = vmatmul.mubr.bf16.gmra.mrb[0].mxu0 %v1347
    %v1466 = vpop.f32.mrb[0].mxu0
    %v1467 = vadd.f32 %v1310, %v1466
    %v1468 = vpop.f32.mrb[0].mxu0
    %v1469 = vpop.f32.mrb[0].mxu0
    %v1470 = vadd.f32 %v1310, %v1469
    %v1471 = vpop.f32.mrb[0].mxu0
    %1472 = vmatprep.mubr.bf16.mxu0 0
    %1473 = vmatmul.mubr.bf16.gmra.mrb[0].mxu0 %v1348
    %v1474 = vpop.f32.mrb[0].mxu0
    %v1475 = vadd.f32 %v1310, %v1474
    %v1476 = vpop.f32.mrb[0].mxu0
    %v1477 = vpop.f32.mrb[0].mxu0
    %v1478 = vadd.f32 %v1310, %v1477
    %v1479 = vpop.f32.mrb[0].mxu0
    %1480 = vmatprep.mubr.bf16.mxu0 0
    %1481 = vmatmul.mubr.bf16.gmra.mrb[0].mxu0 %v1349
    %v1482 = vpop.f32.mrb[0].mxu0
    %v1483 = vadd.f32 %v1310, %v1482
    %v1484 = vpop.f32.mrb[0].mxu0
    %v1485 = vpop.f32.mrb[0].mxu0
    %v1486 = vadd.f32 %v1310, %v1485
    %v1487 = vpop.f32.mrb[0].mxu0
    %1488 = vmatprep.mubr.bf16.mxu0 0
    %1489 = vmatmul.mubr.bf16.gmra.mrb[0].mxu0 %v1350
    %v1490 = vpop.f32.mrb[0].mxu0
    %v1491 = vadd.f32 %v1310, %v1490
    %v1492 = vpop.f32.mrb[0].mxu0
    %v1493 = vpop.f32.mrb[0].mxu0
    %v1494 = vadd.f32 %v1310, %v1493
    %v1495 = vpop.f32.mrb[0].mxu0
    %1496 = vmatprep.mubr.bf16.mxu0 0
    %1497 = vmatmul.mubr.bf16.gmra.mrb[0].mxu0 %v1351
    %v1498 = vpop.f32.mrb[0].mxu0
    %v1499 = vadd.f32 %v1310, %v1498
    %v1500 = vpop.f32.mrb[0].mxu0
    %v1501 = vpop.f32.mrb[0].mxu0
    %v1502 = vadd.f32 %v1310, %v1501
    %v1503 = vpop.f32.mrb[0].mxu0
    %1504 = vdwg.mxu0
    %1505 = vmatprep.subr.bf16.mxu0 0
    %1506 = vmatpush1.bf16.msra.mxu0 %v1298
    %1507 = vmatprep.subr.bf16.mxu0 0
    %1508 = vmatpush1.bf16.msra.mxu0 %v1299
    %1509 = vmatprep.subr.bf16.mxu0 0
    %1510 = vmatpush1.bf16.msra.mxu0 %v1300
    %1511 = vmatprep.subr.bf16.mxu0 0
    %1512 = vmatpush1.bf16.msra.mxu0 %v1301
    %1513 = vmatprep.subr.bf16.mxu0 0
    %1514 = vmatpush1.bf16.msra.mxu0 %v1302
    %1515 = vmatprep.subr.bf16.mxu0 0
    %1516 = vmatpush1.bf16.msra.mxu0 %v1303
    %1517 = vmatprep.subr.bf16.mxu0 0
    %1518 = vmatpush1.bf16.msra.mxu0 %v1304
    %1519 = vmatprep.subr.bf16.mxu0 0
    %1520 = vmatpush1.bf16.msra.mxu0 %v1305
    %1521 = vmatprep.subr.bf16.mxu0 0
    %1522 = vmatpush1.bf16.msra.mxu0 0
    %1523 = vmatprep.subr.bf16.mxu0 0
    %1524 = vmatpush1.bf16.msra.mxu0 0
    %1525 = vmatprep.subr.bf16.mxu0 0
    %1526 = vmatpush1.bf16.msra.mxu0 0
    %1527 = vmatprep.subr.bf16.mxu0 0
    %1528 = vmatpush1.bf16.msra.mxu0 0
    %1529 = vmatprep.subr.bf16.mxu0 0
    %1530 = vmatpush1.bf16.msra.mxu0 0
    %1531 = vmatprep.subr.bf16.mxu0 0
    %1532 = vmatpush1.bf16.msra.mxu0 0
    %1533 = vmatprep.subr.bf16.mxu0 0
    %1534 = vmatpush1.bf16.msra.mxu0 0
    %1535 = vmatprep.subr.bf16.mxu0 0
    %1536 = vmatpush1.bf16.msra.mxu0 0
    %1537 = vmatprep.mubr.bf16.mxu0 0
    %1538 = vmatmul.mubr.bf16.gmra.mrb[0].mxu0 %v707
    %v1539 = vpop.f32.mrb[0].mxu0
    %v1540 = vadd.f32 %v1443, %v1539
    %v1541 = vpop.f32.mrb[0].mxu0
    %v1542 = vpop.f32.mrb[0].mxu0
    %v1543 = vadd.f32 %v1446, %v1542
    %v1544 = vpop.f32.mrb[0].mxu0
    %1545 = vmatprep.mubr.bf16.mxu0 0
    %1546 = vmatmul.mubr.bf16.gmra.mrb[0].mxu0 %v708
    %v1547 = vpop.f32.mrb[0].mxu0
    %v1548 = vadd.f32 %v1451, %v1547
    %v1549 = vpop.f32.mrb[0].mxu0
    %v1550 = vpop.f32.mrb[0].mxu0
    %v1551 = vadd.f32 %v1454, %v1550
    %v1552 = vpop.f32.mrb[0].mxu0
    %1553 = vmatprep.mubr.bf16.mxu0 0
    %1554 = vmatmul.mubr.bf16.gmra.mrb[0].mxu0 %v709
    %v1555 = vpop.f32.mrb[0].mxu0
    %v1556 = vadd.f32 %v1459, %v1555
    %v1557 = vpop.f32.mrb[0].mxu0
    %v1558 = vpop.f32.mrb[0].mxu0
    %v1559 = vadd.f32 %v1462, %v1558
    %v1560 = vpop.f32.mrb[0].mxu0
    %1561 = vmatprep.mubr.bf16.mxu0 0
    %1562 = vmatmul.mubr.bf16.gmra.mrb[0].mxu0 %v710
    %v1563 = vpop.f32.mrb[0].mxu0
    %v1564 = vadd.f32 %v1467, %v1563
    %v1565 = vpop.f32.mrb[0].mxu0
    %v1566 = vpop.f32.mrb[0].mxu0
    %v1567 = vadd.f32 %v1470, %v1566
    %v1568 = vpop.f32.mrb[0].mxu0
    %1569 = vmatprep.mubr.bf16.mxu0 0
    %1570 = vmatmul.mubr.bf16.gmra.mrb[0].mxu0 %v711
    %v1571 = vpop.f32.mrb[0].mxu0
    %v1572 = vadd.f32 %v1475, %v1571
    %v1573 = vpop.f32.mrb[0].mxu0
    %v1574 = vpop.f32.mrb[0].mxu0
    %v1575 = vadd.f32 %v1478, %v1574
    %v1576 = vpop.f32.mrb[0].mxu0
    %1577 = vmatprep.mubr.bf16.mxu0 0
    %1578 = vmatmul.mubr.bf16.gmra.mrb[0].mxu0 %v712
    %v1579 = vpop.f32.mrb[0].mxu0
    %v1580 = vadd.f32 %v1483, %v1579
    %v1581 = vpop.f32.mrb[0].mxu0
    %v1582 = vpop.f32.mrb[0].mxu0
    %v1583 = vadd.f32 %v1486, %v1582
    %v1584 = vpop.f32.mrb[0].mxu0
    %1585 = vmatprep.mubr.bf16.mxu0 0
    %1586 = vmatmul.mubr.bf16.gmra.mrb[0].mxu0 %v713
    %v1587 = vpop.f32.mrb[0].mxu0
    %v1588 = vadd.f32 %v1491, %v1587
    %v1589 = vpop.f32.mrb[0].mxu0
    %v1590 = vpop.f32.mrb[0].mxu0
    %v1591 = vadd.f32 %v1494, %v1590
    %v1592 = vpop.f32.mrb[0].mxu0
    %1593 = vmatprep.mubr.bf16.mxu0 0
    %1594 = vmatmul.mubr.bf16.gmra.mrb[0].mxu0 %v714
    %v1595 = vpop.f32.mrb[0].mxu0
    %v1596 = vadd.f32 %v1499, %v1595
    %v1597 = vpop.f32.mrb[0].mxu0
    %v1598 = vpop.f32.mrb[0].mxu0
    %v1599 = vadd.f32 %v1502, %v1598
    %v1600 = vpop.f32.mrb[0].mxu0
    %1601 = vdwg.mxu0
    %v1602 = vmax.f32 %v1540, 0.0
    %v1603 = vmax.f32 %v1543, 0.0
    %v1604 = vmax.f32 %v1548, 0.0
    %v1605 = vmax.f32 %v1551, 0.0
    %v1606 = vmax.f32 %v1556, 0.0
    %v1607 = vmax.f32 %v1559, 0.0
    %v1608 = vmax.f32 %v1564, 0.0
    %v1609 = vmax.f32 %v1567, 0.0
    %v1610 = vmax.f32 %v1572, 0.0
    %v1611 = vmax.f32 %v1575, 0.0
    %v1612 = vmax.f32 %v1580, 0.0
    %v1613 = vmax.f32 %v1583, 0.0
    %v1614 = vmax.f32 %v1588, 0.0
    %v1615 = vmax.f32 %v1591, 0.0
    %v1616 = vmax.f32 %v1596, 0.0
    %v1617 = vmax.f32 %v1599, 0.0
    %v1618 = vpack.c.bf16 %v1603, %v1602
    %v1619 = vpack.c.bf16 %v1605, %v1604
    %v1620 = vpack.c.bf16 %v1607, %v1606
    %v1621 = vpack.c.bf16 %v1609, %v1608
    %v1622 = vpack.c.bf16 %v1611, %v1610
    %v1623 = vpack.c.bf16 %v1613, %v1612
    %v1624 = vpack.c.bf16 %v1615, %v1614
    %v1625 = vpack.c.bf16 %v1617, %v1616
    %1626 = vmatprep.subr.bf16.mxu0 0
    %1627 = vmatpush1.bf16.msra.mxu0 %v1618
    %1628 = vmatprep.subr.bf16.mxu0 0
    %1629 = vmatpush1.bf16.msra.mxu0 %v1619
    %1630 = vmatprep.subr.bf16.mxu0 0
    %1631 = vmatpush1.bf16.msra.mxu0 %v1620
    %1632 = vmatprep.subr.bf16.mxu0 0
    %1633 = vmatpush1.bf16.msra.mxu0 %v1621
    %1634 = vmatprep.subr.bf16.mxu0 0
    %1635 = vmatpush1.bf16.msra.mxu0 %v1622
    %1636 = vmatprep.subr.bf16.mxu0 0
    %1637 = vmatpush1.bf16.msra.mxu0 %v1623
    %1638 = vmatprep.subr.bf16.mxu0 0
    %1639 = vmatpush1.bf16.msra.mxu0 %v1624
    %1640 = vmatprep.subr.bf16.mxu0 0
    %1641 = vmatpush1.bf16.msra.mxu0 %v1625
    %1642 = vmatprep.subr.bf16.mxu0 0
    %1643 = vmatpush1.bf16.msra.mxu0 0
    %1644 = vmatprep.subr.bf16.mxu0 0
    %1645 = vmatpush1.bf16.msra.mxu0 0
    %1646 = vmatprep.subr.bf16.mxu0 0
    %1647 = vmatpush1.bf16.msra.mxu0 0
    %1648 = vmatprep.subr.bf16.mxu0 0
    %1649 = vmatpush1.bf16.msra.mxu0 0
    %1650 = vmatprep.subr.bf16.mxu0 0
    %1651 = vmatpush1.bf16.msra.mxu0 0
    %1652 = vmatprep.subr.bf16.mxu0 0
    %1653 = vmatpush1.bf16.msra.mxu0 0
    %1654 = vmatprep.subr.bf16.mxu0 0
    %1655 = vmatpush1.bf16.msra.mxu0 0
    %1656 = vmatprep.subr.bf16.mxu0 0
    %1657 = vmatpush1.bf16.msra.mxu0 0
    %1658 = vmatprep.mubr.bf16.mxu0 0
    %1659 = vmatmul.mubr.bf16.gmra.mrb[0].mxu0 %v876
    %v1660 = vpop.f32.mrb[0].mxu0
    %v1661 = vadd.f32 0.0, %v1660
    %v1662 = vpop.f32.mrb[0].mxu0
    %v1663 = vpop.f32.mrb[0].mxu0
    %v1664 = vadd.f32 0.0, %v1663
    %v1665 = vpop.f32.mrb[0].mxu0
    %1666 = vmatprep.mubr.bf16.mxu0 0
    %1667 = vmatmul.mubr.bf16.gmra.mrb[0].mxu0 %v877
    %v1668 = vpop.f32.mrb[0].mxu0
    %v1669 = vadd.f32 0.0, %v1668
    %v1670 = vpop.f32.mrb[0].mxu0
    %v1671 = vpop.f32.mrb[0].mxu0
    %v1672 = vadd.f32 0.0, %v1671
    %v1673 = vpop.f32.mrb[0].mxu0
    %1674 = vmatprep.mubr.bf16.mxu0 0
    %1675 = vmatmul.mubr.bf16.gmra.mrb[0].mxu0 %v878
    %v1676 = vpop.f32.mrb[0].mxu0
    %v1677 = vadd.f32 0.0, %v1676
    %v1678 = vpop.f32.mrb[0].mxu0
    %v1679 = vpop.f32.mrb[0].mxu0
    %v1680 = vadd.f32 0.0, %v1679
    %v1681 = vpop.f32.mrb[0].mxu0
    %1682 = vmatprep.mubr.bf16.mxu0 0
    %1683 = vmatmul.mubr.bf16.gmra.mrb[0].mxu0 %v879
    %v1684 = vpop.f32.mrb[0].mxu0
    %v1685 = vadd.f32 0.0, %v1684
    %v1686 = vpop.f32.mrb[0].mxu0
    %v1687 = vpop.f32.mrb[0].mxu0
    %v1688 = vadd.f32 0.0, %v1687
    %v1689 = vpop.f32.mrb[0].mxu0
    %1690 = vmatprep.mubr.bf16.mxu0 0
    %1691 = vmatmul.mubr.bf16.gmra.mrb[0].mxu0 %v880
    %v1692 = vpop.f32.mrb[0].mxu0
    %v1693 = vadd.f32 0.0, %v1692
    %v1694 = vpop.f32.mrb[0].mxu0
    %v1695 = vpop.f32.mrb[0].mxu0
    %v1696 = vadd.f32 0.0, %v1695
    %v1697 = vpop.f32.mrb[0].mxu0
    %1698 = vmatprep.mubr.bf16.mxu0 0
    %1699 = vmatmul.mubr.bf16.gmra.mrb[0].mxu0 %v881
    %v1700 = vpop.f32.mrb[0].mxu0
    %v1701 = vadd.f32 0.0, %v1700
    %v1702 = vpop.f32.mrb[0].mxu0
    %v1703 = vpop.f32.mrb[0].mxu0
    %v1704 = vadd.f32 0.0, %v1703
    %v1705 = vpop.f32.mrb[0].mxu0
    %1706 = vmatprep.mubr.bf16.mxu0 0
    %1707 = vmatmul.mubr.bf16.gmra.mrb[0].mxu0 %v882
    %v1708 = vpop.f32.mrb[0].mxu0
    %v1709 = vadd.f32 0.0, %v1708
    %v1710 = vpop.f32.mrb[0].mxu0
    %v1711 = vpop.f32.mrb[0].mxu0
    %v1712 = vadd.f32 0.0, %v1711
    %v1713 = vpop.f32.mrb[0].mxu0
    %1714 = vmatprep.mubr.bf16.mxu0 0
    %1715 = vmatmul.mubr.bf16.gmra.mrb[0].mxu0 %v883
    %v1716 = vpop.f32.mrb[0].mxu0
    %v1717 = vadd.f32 0.0, %v1716
    %v1718 = vpop.f32.mrb[0].mxu0
    %v1719 = vpop.f32.mrb[0].mxu0
    %v1720 = vadd.f32 0.0, %v1719
    %v1721 = vpop.f32.mrb[0].mxu0
    %1722 = vdwg.mxu0
    %v1724 = vlaneseq
    %v1725 = vshrl.u32 %v1724, 7
    %v1726 = vsub.s32 0, %v1725
    %v1727 = vrot.slane %v1088, %v1726
    %v1729 = vadd.f32 %v1222, %v1727
    %v1730 = vadd.f32 %v1226, %v1727
    %v1731 = vadd.f32 %v1232, %v1727
    %v1732 = vadd.f32 %v1236, %v1727
    %v1733 = vadd.f32 %v1242, %v1727
    %v1734 = vadd.f32 %v1246, %v1727
    %v1735 = vadd.f32 %v1252, %v1727
    %v1736 = vadd.f32 %v1256, %v1727
    %v1737 = vadd.f32 %v1262, %v1727
    %v1738 = vadd.f32 %v1266, %v1727
    %v1739 = vadd.f32 %v1272, %v1727
    %v1740 = vadd.f32 %v1276, %v1727
    %v1741 = vadd.f32 %v1282, %v1727
    %v1742 = vadd.f32 %v1286, %v1727
    %v1743 = vadd.f32 %v1292, %v1727
    %v1744 = vadd.f32 %v1296, %v1727
    %v1745 = vadd.f32 %v1729, %v1661
    %v1746 = vadd.f32 %v1730, %v1664
    %v1747 = vadd.f32 %v1731, %v1669
    %v1748 = vadd.f32 %v1732, %v1672
    %v1749 = vadd.f32 %v1733, %v1677
    %v1750 = vadd.f32 %v1734, %v1680
    %v1751 = vadd.f32 %v1735, %v1685
    %v1752 = vadd.f32 %v1736, %v1688
    %v1753 = vadd.f32 %v1737, %v1693
    %v1754 = vadd.f32 %v1738, %v1696
    %v1755 = vadd.f32 %v1739, %v1701
    %v1756 = vadd.f32 %v1740, %v1704
    %v1757 = vadd.f32 %v1741, %v1709
    %v1758 = vadd.f32 %v1742, %v1712
    %v1759 = vadd.f32 %v1743, %v1717
    %v1760 = vadd.f32 %v1744, %v1720
    %v1761 = vmax.f32 %v1745, 0.0
    %v1762 = vmax.f32 %v1746, 0.0
    %v1763 = vmax.f32 %v1747, 0.0
    %v1764 = vmax.f32 %v1748, 0.0
    %v1765 = vmax.f32 %v1749, 0.0
    %v1766 = vmax.f32 %v1750, 0.0
    %v1767 = vmax.f32 %v1751, 0.0
    %v1768 = vmax.f32 %v1752, 0.0
    %v1769 = vmax.f32 %v1753, 0.0
    %v1770 = vmax.f32 %v1754, 0.0
    %v1771 = vmax.f32 %v1755, 0.0
    %v1772 = vmax.f32 %v1756, 0.0
    %v1773 = vmax.f32 %v1757, 0.0
    %v1774 = vmax.f32 %v1758, 0.0
    %v1775 = vmax.f32 %v1759, 0.0
    %v1776 = vmax.f32 %v1760, 0.0
    %v1777 = vpack.c.bf16 %v1762, %v1761
    %v1778 = vpack.c.bf16 %v1764, %v1763
    %v1779 = vpack.c.bf16 %v1766, %v1765
    %v1780 = vpack.c.bf16 %v1768, %v1767
    %v1781 = vpack.c.bf16 %v1770, %v1769
    %v1782 = vpack.c.bf16 %v1772, %v1771
    %v1783 = vpack.c.bf16 %v1774, %v1773
    %v1784 = vpack.c.bf16 %v1776, %v1775
    %s1785 = scalar_lea.vmem [#allocation11], 256
    %v1786 = vld [vmem:[%s1785] sm:$0xff]
    %v1787 = vld [vmem:[%s1785 + $0x8] sm:$0xff]
    %v1788 = vld [vmem:[%s1785 + $0x10] sm:$0xff]
    %v1789 = vld [vmem:[%s1785 + $0x18] sm:$0xff]
    %v1790 = vld [vmem:[%s1785 + $0x20] sm:$0xff]
    %v1791 = vld [vmem:[%s1785 + $0x28] sm:$0xff]
    %v1792 = vld [vmem:[%s1785 + $0x30] sm:$0xff]
    %v1793 = vld [vmem:[%s1785 + $0x38] sm:$0xff]
    %v1794 = vld [vmem:[%s1785 + $0x40] sm:$0xff]
    %v1795 = vld [vmem:[%s1785 + $0x48] sm:$0xff]
    %v1796 = vld [vmem:[%s1785 + $0x50] sm:$0xff]
    %v1797 = vld [vmem:[%s1785 + $0x58] sm:$0xff]
    %v1798 = vld [vmem:[%s1785 + $0x60] sm:$0xff]
    %v1799 = vld [vmem:[%s1785 + $0x68] sm:$0xff]
    %v1800 = vld [vmem:[%s1785 + $0x70] sm:$0xff]
    %v1801 = vld [vmem:[%s1785 + $0x78] sm:$0xff]
    %s1802 = scalar_lea.vmem [#allocation13], 128
    %v1803 = vld [vmem:[%s1802] sm:$0xf]
    %v1804 = vld [vmem:[%s1802 + $0x4] sm:$0xf]
    %v1805 = vld [vmem:[%s1802 + $0x8] sm:$0xf]
    %v1806 = vld [vmem:[%s1802 + $0xc] sm:$0xf]
    %v1807 = vld [vmem:[%s1802 + $0x10] sm:$0xf]
    %v1808 = vld [vmem:[%s1802 + $0x14] sm:$0xf]
    %v1809 = vld [vmem:[%s1802 + $0x18] sm:$0xf]
    %v1810 = vld [vmem:[%s1802 + $0x1c] sm:$0xf]
    %v1811 = vld [vmem:[%s1802 + $0x20] sm:$0xf]
    %v1812 = vld [vmem:[%s1802 + $0x24] sm:$0xf]
    %v1813 = vld [vmem:[%s1802 + $0x28] sm:$0xf]
    %v1814 = vld [vmem:[%s1802 + $0x2c] sm:$0xf]
    %v1815 = vld [vmem:[%s1802 + $0x30] sm:$0xf]
    %v1816 = vld [vmem:[%s1802 + $0x34] sm:$0xf]
    %v1817 = vld [vmem:[%s1802 + $0x38] sm:$0xf]
    %v1818 = vld [vmem:[%s1802 + $0x3c] sm:$0xf]
    %s1819 = scalar_lea.vmem %s7, 2
    %v1820 = vld [vmem:[%s1819] sm:$0x1]
    %s1821 = scalar_lea.vmem %s8, 2
    %v1822 = vld [vmem:[%s1821] sm:$0x1]
    %v1839 = vunpack.c.l.b16 %v1786
    %v1840 = vunpack.c.h.b16 %v1786
    %v1841 = vunpack.c.l.b16 %v1787
    %v1842 = vunpack.c.h.b16 %v1787
    %v1843 = vunpack.c.l.b16 %v1788
    %v1844 = vunpack.c.h.b16 %v1788
    %v1845 = vunpack.c.l.b16 %v1789
    %v1846 = vunpack.c.h.b16 %v1789
    %v1847 = vunpack.c.l.b16 %v1790
    %v1848 = vunpack.c.h.b16 %v1790
    %v1849 = vunpack.c.l.b16 %v1791
    %v1850 = vunpack.c.h.b16 %v1791
    %v1851 = vunpack.c.l.b16 %v1792
    %v1852 = vunpack.c.h.b16 %v1792
    %v1853 = vunpack.c.l.b16 %v1793
    %v1854 = vunpack.c.h.b16 %v1793
    %v1855 = vunpack.c.l.b16 %v1794
    %v1856 = vunpack.c.h.b16 %v1794
    %v1857 = vunpack.c.l.b16 %v1795
    %v1858 = vunpack.c.h.b16 %v1795
    %v1859 = vunpack.c.l.b16 %v1796
    %v1860 = vunpack.c.h.b16 %v1796
    %v1861 = vunpack.c.l.b16 %v1797
    %v1862 = vunpack.c.h.b16 %v1797
    %v1863 = vunpack.c.l.b16 %v1798
    %v1864 = vunpack.c.h.b16 %v1798
    %v1865 = vunpack.c.l.b16 %v1799
    %v1866 = vunpack.c.h.b16 %v1799
    %v1867 = vunpack.c.l.b16 %v1800
    %v1868 = vunpack.c.h.b16 %v1800
    %v1869 = vunpack.c.l.b16 %v1801
    %v1870 = vunpack.c.h.b16 %v1801
    %v1871 = vpack.c.b16 %v1841, %v1839
    %v1872 = vpack.c.b16 %v1842, %v1840
    %v1873 = vpack.c.b16 %v1845, %v1843
    %v1874 = vpack.c.b16 %v1846, %v1844
    %v1875 = vpack.c.b16 %v1849, %v1847
    %v1876 = vpack.c.b16 %v1850, %v1848
    %v1877 = vpack.c.b16 %v1853, %v1851
    %v1878 = vpack.c.b16 %v1854, %v1852
    %v1879 = vpack.c.b16 %v1857, %v1855
    %v1880 = vpack.c.b16 %v1858, %v1856
    %v1881 = vpack.c.b16 %v1861, %v1859
    %v1882 = vpack.c.b16 %v1862, %v1860
    %v1883 = vpack.c.b16 %v1865, %v1863
    %v1884 = vpack.c.b16 %v1866, %v1864
    %v1885 = vpack.c.b16 %v1869, %v1867
    %v1886 = vpack.c.b16 %v1870, %v1868
    %1903 = vmatprep.subr.bf16.mxu0 %v1872
    %1904 = vmatpush1.bf16.msra.mxu0 %v1871
    %1905 = vmatprep.subr.bf16.mxu0 %v1874
    %1906 = vmatpush1.bf16.msra.mxu0 %v1873
    %1907 = vmatprep.subr.bf16.mxu0 %v1876
    %1908 = vmatpush1.bf16.msra.mxu0 %v1875
    %1909 = vmatprep.subr.bf16.mxu0 %v1878
    %1910 = vmatpush1.bf16.msra.mxu0 %v1877
    %1911 = vmatprep.subr.bf16.mxu0 %v1880
    %1912 = vmatpush1.bf16.msra.mxu0 %v1879
    %1913 = vmatprep.subr.bf16.mxu0 %v1882
    %1914 = vmatpush1.bf16.msra.mxu0 %v1881
    %1915 = vmatprep.subr.bf16.mxu0 %v1884
    %1916 = vmatpush1.bf16.msra.mxu0 %v1883
    %1917 = vmatprep.subr.bf16.mxu0 %v1886
    %1918 = vmatpush1.bf16.msra.mxu0 %v1885
    %1919 = vmatprep.subr.bf16.mxu0 0
    %1920 = vmatpush1.bf16.msra.mxu0 0
    %1921 = vmatprep.subr.bf16.mxu0 0
    %1922 = vmatpush1.bf16.msra.mxu0 0
    %1923 = vmatprep.subr.bf16.mxu0 0
    %1924 = vmatpush1.bf16.msra.mxu0 0
    %1925 = vmatprep.subr.bf16.mxu0 0
    %1926 = vmatpush1.bf16.msra.mxu0 0
    %1927 = vmatprep.subr.bf16.mxu0 0
    %1928 = vmatpush1.bf16.msra.mxu0 0
    %1929 = vmatprep.subr.bf16.mxu0 0
    %1930 = vmatpush1.bf16.msra.mxu0 0
    %1931 = vmatprep.subr.bf16.mxu0 0
    %1932 = vmatpush1.bf16.msra.mxu0 0
    %1933 = vmatprep.subr.bf16.mxu0 0
    %1934 = vmatpush1.bf16.msra.mxu0 0
    %1935 = vmatprep.mubr.bf16.mxu0 0
    %1936 = vmatmul.mubr.bf16.gmra.mrb[0].mxu0 %v1777
    %v1937 = vpop.f32.mrb[0].mxu0
    %v1938 = vadd.f32 0.0, %v1937
    %v1939 = vpop.f32.mrb[0].mxu0
    %v1940 = vadd.f32 0.0, %v1939
    %v1941 = vpop.f32.mrb[0].mxu0
    %v1942 = vadd.f32 0.0, %v1941
    %v1943 = vpop.f32.mrb[0].mxu0
    %v1944 = vadd.f32 0.0, %v1943
    %1945 = vmatprep.mubr.bf16.mxu0 0
    %1946 = vmatmul.mubr.bf16.gmra.mrb[0].mxu0 %v1778
    %v1947 = vpop.f32.mrb[0].mxu0
    %v1948 = vadd.f32 0.0, %v1947
    %v1949 = vpop.f32.mrb[0].mxu0
    %v1950 = vadd.f32 0.0, %v1949
    %v1951 = vpop.f32.mrb[0].mxu0
    %v1952 = vadd.f32 0.0, %v1951
    %v1953 = vpop.f32.mrb[0].mxu0
    %v1954 = vadd.f32 0.0, %v1953
    %1955 = vmatprep.mubr.bf16.mxu0 0
    %1956 = vmatmul.mubr.bf16.gmra.mrb[0].mxu0 %v1779
    %v1957 = vpop.f32.mrb[0].mxu0
    %v1958 = vadd.f32 0.0, %v1957
    %v1959 = vpop.f32.mrb[0].mxu0
    %v1960 = vadd.f32 0.0, %v1959
    %v1961 = vpop.f32.mrb[0].mxu0
    %v1962 = vadd.f32 0.0, %v1961
    %v1963 = vpop.f32.mrb[0].mxu0
    %v1964 = vadd.f32 0.0, %v1963
    %1965 = vmatprep.mubr.bf16.mxu0 0
    %1966 = vmatmul.mubr.bf16.gmra.mrb[0].mxu0 %v1780
    %v1967 = vpop.f32.mrb[0].mxu0
    %v1968 = vadd.f32 0.0, %v1967
    %v1969 = vpop.f32.mrb[0].mxu0
    %v1970 = vadd.f32 0.0, %v1969
    %v1971 = vpop.f32.mrb[0].mxu0
    %v1972 = vadd.f32 0.0, %v1971
    %v1973 = vpop.f32.mrb[0].mxu0
    %v1974 = vadd.f32 0.0, %v1973
    %1975 = vmatprep.mubr.bf16.mxu0 0
    %1976 = vmatmul.mubr.bf16.gmra.mrb[0].mxu0 %v1781
    %v1977 = vpop.f32.mrb[0].mxu0
    %v1978 = vadd.f32 0.0, %v1977
    %v1979 = vpop.f32.mrb[0].mxu0
    %v1980 = vadd.f32 0.0, %v1979
    %v1981 = vpop.f32.mrb[0].mxu0
    %v1982 = vadd.f32 0.0, %v1981
    %v1983 = vpop.f32.mrb[0].mxu0
    %v1984 = vadd.f32 0.0, %v1983
    %1985 = vmatprep.mubr.bf16.mxu0 0
    %1986 = vmatmul.mubr.bf16.gmra.mrb[0].mxu0 %v1782
    %v1987 = vpop.f32.mrb[0].mxu0
    %v1988 = vadd.f32 0.0, %v1987
    %v1989 = vpop.f32.mrb[0].mxu0
    %v1990 = vadd.f32 0.0, %v1989
    %v1991 = vpop.f32.mrb[0].mxu0
    %v1992 = vadd.f32 0.0, %v1991
    %v1993 = vpop.f32.mrb[0].mxu0
    %v1994 = vadd.f32 0.0, %v1993
    %1995 = vmatprep.mubr.bf16.mxu0 0
    %1996 = vmatmul.mubr.bf16.gmra.mrb[0].mxu0 %v1783
    %v1997 = vpop.f32.mrb[0].mxu0
    %v1998 = vadd.f32 0.0, %v1997
    %v1999 = vpop.f32.mrb[0].mxu0
    %v2000 = vadd.f32 0.0, %v1999
    %v2001 = vpop.f32.mrb[0].mxu0
    %v2002 = vadd.f32 0.0, %v2001
    %v2003 = vpop.f32.mrb[0].mxu0
    %v2004 = vadd.f32 0.0, %v2003
    %2005 = vmatprep.mubr.bf16.mxu0 0
    %2006 = vmatmul.mubr.bf16.gmra.mrb[0].mxu0 %v1784
    %v2007 = vpop.f32.mrb[0].mxu0
    %v2008 = vadd.f32 0.0, %v2007
    %v2009 = vpop.f32.mrb[0].mxu0
    %v2010 = vadd.f32 0.0, %v2009
    %v2011 = vpop.f32.mrb[0].mxu0
    %v2012 = vadd.f32 0.0, %v2011
    %v2013 = vpop.f32.mrb[0].mxu0
    %v2014 = vadd.f32 0.0, %v2013
    %2015 = vdwg.mxu0
    %v2016 = vpack.c.bf16 %v1942, %v1938
    %v2017 = vpack.c.bf16 %v1952, %v1948
    %v2018 = vpack.c.bf16 %v1962, %v1958
    %v2019 = vpack.c.bf16 %v1972, %v1968
    %v2020 = vpack.c.bf16 %v1982, %v1978
    %v2021 = vpack.c.bf16 %v1992, %v1988
    %v2022 = vpack.c.bf16 %v2002, %v1998
    %v2023 = vpack.c.bf16 %v2012, %v2008
    %v2025 = vlaneseq
    %v2026 = vshrl.u32 %v2025, 7
    %v2027 = vsub.s32 0, %v2026
    %v2028 = vrot.slane %v1820, %v2027
    %v2046 = vunpack.c.l.b16 %v1803
    %v2047 = vunpack.c.l.b16 %v1804
    %v2048 = vunpack.c.l.b16 %v1805
    %v2049 = vunpack.c.l.b16 %v1806
    %v2050 = vunpack.c.l.b16 %v1807
    %v2051 = vunpack.c.l.b16 %v1808
    %v2052 = vunpack.c.l.b16 %v1809
    %v2053 = vunpack.c.l.b16 %v1810
    %v2054 = vunpack.c.l.b16 %v1811
    %v2055 = vunpack.c.l.b16 %v1812
    %v2056 = vunpack.c.l.b16 %v1813
    %v2057 = vunpack.c.l.b16 %v1814
    %v2058 = vunpack.c.l.b16 %v1815
    %v2059 = vunpack.c.l.b16 %v1816
    %v2060 = vunpack.c.l.b16 %v1817
    %v2061 = vunpack.c.l.b16 %v1818
    %v2062 = vpack.c.b16 %v2047, %v2046
    %v2063 = vpack.c.b16 %v2049, %v2048
    %v2064 = vpack.c.b16 %v2051, %v2050
    %v2065 = vpack.c.b16 %v2053, %v2052
    %v2066 = vpack.c.b16 %v2055, %v2054
    %v2067 = vpack.c.b16 %v2057, %v2056
    %v2068 = vpack.c.b16 %v2059, %v2058
    %v2069 = vpack.c.b16 %v2061, %v2060
    %2078 = vmatprep.subr.bf16.mxu0 0
    %2079 = vmatpush1.bf16.msra.mxu0 %v2062
    %2080 = vmatprep.subr.bf16.mxu0 0
    %2081 = vmatpush1.bf16.msra.mxu0 %v2063
    %2082 = vmatprep.subr.bf16.mxu0 0
    %2083 = vmatpush1.bf16.msra.mxu0 %v2064
    %2084 = vmatprep.subr.bf16.mxu0 0
    %2085 = vmatpush1.bf16.msra.mxu0 %v2065
    %2086 = vmatprep.subr.bf16.mxu0 0
    %2087 = vmatpush1.bf16.msra.mxu0 %v2066
    %2088 = vmatprep.subr.bf16.mxu0 0
    %2089 = vmatpush1.bf16.msra.mxu0 %v2067
    %2090 = vmatprep.subr.bf16.mxu0 0
    %2091 = vmatpush1.bf16.msra.mxu0 %v2068
    %2092 = vmatprep.subr.bf16.mxu0 0
    %2093 = vmatpush1.bf16.msra.mxu0 %v2069
    %2094 = vmatprep.subr.bf16.mxu0 0
    %2095 = vmatpush1.bf16.msra.mxu0 0
    %2096 = vmatprep.subr.bf16.mxu0 0
    %2097 = vmatpush1.bf16.msra.mxu0 0
    %2098 = vmatprep.subr.bf16.mxu0 0
    %2099 = vmatpush1.bf16.msra.mxu0 0
    %2100 = vmatprep.subr.bf16.mxu0 0
    %2101 = vmatpush1.bf16.msra.mxu0 0
    %2102 = vmatprep.subr.bf16.mxu0 0
    %2103 = vmatpush1.bf16.msra.mxu0 0
    %2104 = vmatprep.subr.bf16.mxu0 0
    %2105 = vmatpush1.bf16.msra.mxu0 0
    %2106 = vmatprep.subr.bf16.mxu0 0
    %2107 = vmatpush1.bf16.msra.mxu0 0
    %2108 = vmatprep.subr.bf16.mxu0 0
    %2109 = vmatpush1.bf16.msra.mxu0 0
    %2110 = vmatprep.mubr.bf16.mxu0 0
    %2111 = vmatmul.mubr.bf16.gmra.mrb[0].mxu0 %v1344
    %v2112 = vpop.f32.mrb[0].mxu0
    %v2113 = vadd.f32 %v2028, %v2112
    %v2114 = vpop.f32.mrb[0].mxu0
    %v2115 = vpop.f32.mrb[0].mxu0
    %v2116 = vadd.f32 %v2028, %v2115
    %v2117 = vpop.f32.mrb[0].mxu0
    %2118 = vmatprep.mubr.bf16.mxu0 0
    %2119 = vmatmul.mubr.bf16.gmra.mrb[0].mxu0 %v1345
    %v2120 = vpop.f32.mrb[0].mxu0
    %v2121 = vadd.f32 %v2028, %v2120
    %v2122 = vpop.f32.mrb[0].mxu0
    %v2123 = vpop.f32.mrb[0].mxu0
    %v2124 = vadd.f32 %v2028, %v2123
    %v2125 = vpop.f32.mrb[0].mxu0
    %2126 = vmatprep.mubr.bf16.mxu0 0
    %2127 = vmatmul.mubr.bf16.gmra.mrb[0].mxu0 %v1346
    %v2128 = vpop.f32.mrb[0].mxu0
    %v2129 = vadd.f32 %v2028, %v2128
    %v2130 = vpop.f32.mrb[0].mxu0
    %v2131 = vpop.f32.mrb[0].mxu0
    %v2132 = vadd.f32 %v2028, %v2131
    %v2133 = vpop.f32.mrb[0].mxu0
    %2134 = vmatprep.mubr.bf16.mxu0 0
    %2135 = vmatmul.mubr.bf16.gmra.mrb[0].mxu0 %v1347
    %v2136 = vpop.f32.mrb[0].mxu0
    %v2137 = vadd.f32 %v2028, %v2136
    %v2138 = vpop.f32.mrb[0].mxu0
    %v2139 = vpop.f32.mrb[0].mxu0
    %v2140 = vadd.f32 %v2028, %v2139
    %v2141 = vpop.f32.mrb[0].mxu0
    %2142 = vmatprep.mubr.bf16.mxu0 0
    %2143 = vmatmul.mubr.bf16.gmra.mrb[0].mxu0 %v1348
    %v2144 = vpop.f32.mrb[0].mxu0
    %v2145 = vadd.f32 %v2028, %v2144
    %v2146 = vpop.f32.mrb[0].mxu0
    %v2147 = vpop.f32.mrb[0].mxu0
    %v2148 = vadd.f32 %v2028, %v2147
    %v2149 = vpop.f32.mrb[0].mxu0
    %2150 = vmatprep.mubr.bf16.mxu0 0
    %2151 = vmatmul.mubr.bf16.gmra.mrb[0].mxu0 %v1349
    %v2152 = vpop.f32.mrb[0].mxu0
    %v2153 = vadd.f32 %v2028, %v2152
    %v2154 = vpop.f32.mrb[0].mxu0
    %v2155 = vpop.f32.mrb[0].mxu0
    %v2156 = vadd.f32 %v2028, %v2155
    %v2157 = vpop.f32.mrb[0].mxu0
    %2158 = vmatprep.mubr.bf16.mxu0 0
    %2159 = vmatmul.mubr.bf16.gmra.mrb[0].mxu0 %v1350
    %v2160 = vpop.f32.mrb[0].mxu0
    %v2161 = vadd.f32 %v2028, %v2160
    %v2162 = vpop.f32.mrb[0].mxu0
    %v2163 = vpop.f32.mrb[0].mxu0
    %v2164 = vadd.f32 %v2028, %v2163
    %v2165 = vpop.f32.mrb[0].mxu0
    %2166 = vmatprep.mubr.bf16.mxu0 0
    %2167 = vmatmul.mubr.bf16.gmra.mrb[0].mxu0 %v1351
    %v2168 = vpop.f32.mrb[0].mxu0
    %v2169 = vadd.f32 %v2028, %v2168
    %v2170 = vpop.f32.mrb[0].mxu0
    %v2171 = vpop.f32.mrb[0].mxu0
    %v2172 = vadd.f32 %v2028, %v2171
    %v2173 = vpop.f32.mrb[0].mxu0
    %2174 = vdwg.mxu0
    %2175 = vmatprep.subr.bf16.mxu0 0
    %2176 = vmatpush1.bf16.msra.mxu0 %v2016
    %2177 = vmatprep.subr.bf16.mxu0 0
    %2178 = vmatpush1.bf16.msra.mxu0 %v2017
    %2179 = vmatprep.subr.bf16.mxu0 0
    %2180 = vmatpush1.bf16.msra.mxu0 %v2018
    %2181 = vmatprep.subr.bf16.mxu0 0
    %2182 = vmatpush1.bf16.msra.mxu0 %v2019
    %2183 = vmatprep.subr.bf16.mxu0 0
    %2184 = vmatpush1.bf16.msra.mxu0 %v2020
    %2185 = vmatprep.subr.bf16.mxu0 0
    %2186 = vmatpush1.bf16.msra.mxu0 %v2021
    %2187 = vmatprep.subr.bf16.mxu0 0
    %2188 = vmatpush1.bf16.msra.mxu0 %v2022
    %2189 = vmatprep.subr.bf16.mxu0 0
    %2190 = vmatpush1.bf16.msra.mxu0 %v2023
    %2191 = vmatprep.subr.bf16.mxu0 0
    %2192 = vmatpush1.bf16.msra.mxu0 0
    %2193 = vmatprep.subr.bf16.mxu0 0
    %2194 = vmatpush1.bf16.msra.mxu0 0
    %2195 = vmatprep.subr.bf16.mxu0 0
    %2196 = vmatpush1.bf16.msra.mxu0 0
    %2197 = vmatprep.subr.bf16.mxu0 0
    %2198 = vmatpush1.bf16.msra.mxu0 0
    %2199 = vmatprep.subr.bf16.mxu0 0
    %2200 = vmatpush1.bf16.msra.mxu0 0
    %2201 = vmatprep.subr.bf16.mxu0 0
    %2202 = vmatpush1.bf16.msra.mxu0 0
    %2203 = vmatprep.subr.bf16.mxu0 0
    %2204 = vmatpush1.bf16.msra.mxu0 0
    %2205 = vmatprep.subr.bf16.mxu0 0
    %2206 = vmatpush1.bf16.msra.mxu0 0
    %2207 = vmatprep.mubr.bf16.mxu0 0
    %2208 = vmatmul.mubr.bf16.gmra.mrb[0].mxu0 %v707
    %v2209 = vpop.f32.mrb[0].mxu0
    %v2210 = vadd.f32 %v2113, %v2209
    %v2211 = vpop.f32.mrb[0].mxu0
    %v2212 = vpop.f32.mrb[0].mxu0
    %v2213 = vadd.f32 %v2116, %v2212
    %v2214 = vpop.f32.mrb[0].mxu0
    %2215 = vmatprep.mubr.bf16.mxu0 0
    %2216 = vmatmul.mubr.bf16.gmra.mrb[0].mxu0 %v708
    %v2217 = vpop.f32.mrb[0].mxu0
    %v2218 = vadd.f32 %v2121, %v2217
    %v2219 = vpop.f32.mrb[0].mxu0
    %v2220 = vpop.f32.mrb[0].mxu0
    %v2221 = vadd.f32 %v2124, %v2220
    %v2222 = vpop.f32.mrb[0].mxu0
    %2223 = vmatprep.mubr.bf16.mxu0 0
    %2224 = vmatmul.mubr.bf16.gmra.mrb[0].mxu0 %v709
    %v2225 = vpop.f32.mrb[0].mxu0
    %v2226 = vadd.f32 %v2129, %v2225
    %v2227 = vpop.f32.mrb[0].mxu0
    %v2228 = vpop.f32.mrb[0].mxu0
    %v2229 = vadd.f32 %v2132, %v2228
    %v2230 = vpop.f32.mrb[0].mxu0
    %2231 = vmatprep.mubr.bf16.mxu0 0
    %2232 = vmatmul.mubr.bf16.gmra.mrb[0].mxu0 %v710
    %v2233 = vpop.f32.mrb[0].mxu0
    %v2234 = vadd.f32 %v2137, %v2233
    %v2235 = vpop.f32.mrb[0].mxu0
    %v2236 = vpop.f32.mrb[0].mxu0
    %v2237 = vadd.f32 %v2140, %v2236
    %v2238 = vpop.f32.mrb[0].mxu0
    %2239 = vmatprep.mubr.bf16.mxu0 0
    %2240 = vmatmul.mubr.bf16.gmra.mrb[0].mxu0 %v711
    %v2241 = vpop.f32.mrb[0].mxu0
    %v2242 = vadd.f32 %v2145, %v2241
    %v2243 = vpop.f32.mrb[0].mxu0
    %v2244 = vpop.f32.mrb[0].mxu0
    %v2245 = vadd.f32 %v2148, %v2244
    %v2246 = vpop.f32.mrb[0].mxu0
    %2247 = vmatprep.mubr.bf16.mxu0 0
    %2248 = vmatmul.mubr.bf16.gmra.mrb[0].mxu0 %v712
    %v2249 = vpop.f32.mrb[0].mxu0
    %v2250 = vadd.f32 %v2153, %v2249
    %v2251 = vpop.f32.mrb[0].mxu0
    %v2252 = vpop.f32.mrb[0].mxu0
    %v2253 = vadd.f32 %v2156, %v2252
    %v2254 = vpop.f32.mrb[0].mxu0
    %2255 = vmatprep.mubr.bf16.mxu0 0
    %2256 = vmatmul.mubr.bf16.gmra.mrb[0].mxu0 %v713
    %v2257 = vpop.f32.mrb[0].mxu0
    %v2258 = vadd.f32 %v2161, %v2257
    %v2259 = vpop.f32.mrb[0].mxu0
    %v2260 = vpop.f32.mrb[0].mxu0
    %v2261 = vadd.f32 %v2164, %v2260
    %v2262 = vpop.f32.mrb[0].mxu0
    %2263 = vmatprep.mubr.bf16.mxu0 0
    %2264 = vmatmul.mubr.bf16.gmra.mrb[0].mxu0 %v714
    %v2265 = vpop.f32.mrb[0].mxu0
    %v2266 = vadd.f32 %v2169, %v2265
    %v2267 = vpop.f32.mrb[0].mxu0
    %v2268 = vpop.f32.mrb[0].mxu0
    %v2269 = vadd.f32 %v2172, %v2268
    %v2270 = vpop.f32.mrb[0].mxu0
    %2271 = vdwg.mxu0
    %v2272 = vmax.f32 %v2210, 0.0
    %v2273 = vmax.f32 %v2213, 0.0
    %v2274 = vmax.f32 %v2218, 0.0
    %v2275 = vmax.f32 %v2221, 0.0
    %v2276 = vmax.f32 %v2226, 0.0
    %v2277 = vmax.f32 %v2229, 0.0
    %v2278 = vmax.f32 %v2234, 0.0
    %v2279 = vmax.f32 %v2237, 0.0
    %v2280 = vmax.f32 %v2242, 0.0
    %v2281 = vmax.f32 %v2245, 0.0
    %v2282 = vmax.f32 %v2250, 0.0
    %v2283 = vmax.f32 %v2253, 0.0
    %v2284 = vmax.f32 %v2258, 0.0
    %v2285 = vmax.f32 %v2261, 0.0
    %v2286 = vmax.f32 %v2266, 0.0
    %v2287 = vmax.f32 %v2269, 0.0
    %v2288 = vpack.c.bf16 %v2273, %v2272
    %v2289 = vpack.c.bf16 %v2275, %v2274
    %v2290 = vpack.c.bf16 %v2277, %v2276
    %v2291 = vpack.c.bf16 %v2279, %v2278
    %v2292 = vpack.c.bf16 %v2281, %v2280
    %v2293 = vpack.c.bf16 %v2283, %v2282
    %v2294 = vpack.c.bf16 %v2285, %v2284
    %v2295 = vpack.c.bf16 %v2287, %v2286
    %2296 = vmatprep.subr.bf16.mxu0 0
    %2297 = vmatpush1.bf16.msra.mxu0 %v2288
    %2298 = vmatprep.subr.bf16.mxu0 0
    %2299 = vmatpush1.bf16.msra.mxu0 %v2289
    %2300 = vmatprep.subr.bf16.mxu0 0
    %2301 = vmatpush1.bf16.msra.mxu0 %v2290
    %2302 = vmatprep.subr.bf16.mxu0 0
    %2303 = vmatpush1.bf16.msra.mxu0 %v2291
    %2304 = vmatprep.subr.bf16.mxu0 0
    %2305 = vmatpush1.bf16.msra.mxu0 %v2292
    %2306 = vmatprep.subr.bf16.mxu0 0
    %2307 = vmatpush1.bf16.msra.mxu0 %v2293
    %2308 = vmatprep.subr.bf16.mxu0 0
    %2309 = vmatpush1.bf16.msra.mxu0 %v2294
    %2310 = vmatprep.subr.bf16.mxu0 0
    %2311 = vmatpush1.bf16.msra.mxu0 %v2295
    %2312 = vmatprep.subr.bf16.mxu0 0
    %2313 = vmatpush1.bf16.msra.mxu0 0
    %2314 = vmatprep.subr.bf16.mxu0 0
    %2315 = vmatpush1.bf16.msra.mxu0 0
    %2316 = vmatprep.subr.bf16.mxu0 0
    %2317 = vmatpush1.bf16.msra.mxu0 0
    %2318 = vmatprep.subr.bf16.mxu0 0
    %2319 = vmatpush1.bf16.msra.mxu0 0
    %2320 = vmatprep.subr.bf16.mxu0 0
    %2321 = vmatpush1.bf16.msra.mxu0 0
    %2322 = vmatprep.subr.bf16.mxu0 0
    %2323 = vmatpush1.bf16.msra.mxu0 0
    %2324 = vmatprep.subr.bf16.mxu0 0
    %2325 = vmatpush1.bf16.msra.mxu0 0
    %2326 = vmatprep.subr.bf16.mxu0 0
    %2327 = vmatpush1.bf16.msra.mxu0 0
    %2328 = vmatprep.mubr.bf16.mxu0 0
    %2329 = vmatmul.mubr.bf16.gmra.mrb[0].mxu0 %v876
    %v2330 = vpop.f32.mrb[0].mxu0
    %v2331 = vadd.f32 0.0, %v2330
    %v2332 = vpop.f32.mrb[0].mxu0
    %v2333 = vpop.f32.mrb[0].mxu0
    %v2334 = vadd.f32 0.0, %v2333
    %v2335 = vpop.f32.mrb[0].mxu0
    %2336 = vmatprep.mubr.bf16.mxu0 0
    %2337 = vmatmul.mubr.bf16.gmra.mrb[0].mxu0 %v877
    %v2338 = vpop.f32.mrb[0].mxu0
    %v2339 = vadd.f32 0.0, %v2338
    %v2340 = vpop.f32.mrb[0].mxu0
    %v2341 = vpop.f32.mrb[0].mxu0
    %v2342 = vadd.f32 0.0, %v2341
    %v2343 = vpop.f32.mrb[0].mxu0
    %2344 = vmatprep.mubr.bf16.mxu0 0
    %2345 = vmatmul.mubr.bf16.gmra.mrb[0].mxu0 %v878
    %v2346 = vpop.f32.mrb[0].mxu0
    %v2347 = vadd.f32 0.0, %v2346
    %v2348 = vpop.f32.mrb[0].mxu0
    %v2349 = vpop.f32.mrb[0].mxu0
    %v2350 = vadd.f32 0.0, %v2349
    %v2351 = vpop.f32.mrb[0].mxu0
    %2352 = vmatprep.mubr.bf16.mxu0 0
    %2353 = vmatmul.mubr.bf16.gmra.mrb[0].mxu0 %v879
    %v2354 = vpop.f32.mrb[0].mxu0
    %v2355 = vadd.f32 0.0, %v2354
    %v2356 = vpop.f32.mrb[0].mxu0
    %v2357 = vpop.f32.mrb[0].mxu0
    %v2358 = vadd.f32 0.0, %v2357
    %v2359 = vpop.f32.mrb[0].mxu0
    %2360 = vmatprep.mubr.bf16.mxu0 0
    %2361 = vmatmul.mubr.bf16.gmra.mrb[0].mxu0 %v880
    %v2362 = vpop.f32.mrb[0].mxu0
    %v2363 = vadd.f32 0.0, %v2362
    %v2364 = vpop.f32.mrb[0].mxu0
    %v2365 = vpop.f32.mrb[0].mxu0
    %v2366 = vadd.f32 0.0, %v2365
    %v2367 = vpop.f32.mrb[0].mxu0
    %2368 = vmatprep.mubr.bf16.mxu0 0
    %2369 = vmatmul.mubr.bf16.gmra.mrb[0].mxu0 %v881
    %v2370 = vpop.f32.mrb[0].mxu0
    %v2371 = vadd.f32 0.0, %v2370
    %v2372 = vpop.f32.mrb[0].mxu0
    %v2373 = vpop.f32.mrb[0].mxu0
    %v2374 = vadd.f32 0.0, %v2373
    %v2375 = vpop.f32.mrb[0].mxu0
    %2376 = vmatprep.mubr.bf16.mxu0 0
    %2377 = vmatmul.mubr.bf16.gmra.mrb[0].mxu0 %v882
    %v2378 = vpop.f32.mrb[0].mxu0
    %v2379 = vadd.f32 0.0, %v2378
    %v2380 = vpop.f32.mrb[0].mxu0
    %v2381 = vpop.f32.mrb[0].mxu0
    %v2382 = vadd.f32 0.0, %v2381
    %v2383 = vpop.f32.mrb[0].mxu0
    %2384 = vmatprep.mubr.bf16.mxu0 0
    %2385 = vmatmul.mubr.bf16.gmra.mrb[0].mxu0 %v883
    %v2386 = vpop.f32.mrb[0].mxu0
    %v2387 = vadd.f32 0.0, %v2386
    %v2388 = vpop.f32.mrb[0].mxu0
    %v2389 = vpop.f32.mrb[0].mxu0
    %v2390 = vadd.f32 0.0, %v2389
    %v2391 = vpop.f32.mrb[0].mxu0
    %2392 = vdwg.mxu0
    %v2394 = vlaneseq
    %v2395 = vshrl.u32 %v2394, 7
    %v2396 = vsub.s32 0, %v2395
    %v2397 = vrot.slane %v1822, %v2396
    %v2399 = vadd.f32 %v1940, %v2397
    %v2400 = vadd.f32 %v1944, %v2397
    %v2401 = vadd.f32 %v1950, %v2397
    %v2402 = vadd.f32 %v1954, %v2397
    %v2403 = vadd.f32 %v1960, %v2397
    %v2404 = vadd.f32 %v1964, %v2397
    %v2405 = vadd.f32 %v1970, %v2397
    %v2406 = vadd.f32 %v1974, %v2397
    %v2407 = vadd.f32 %v1980, %v2397
    %v2408 = vadd.f32 %v1984, %v2397
    %v2409 = vadd.f32 %v1990, %v2397
    %v2410 = vadd.f32 %v1994, %v2397
    %v2411 = vadd.f32 %v2000, %v2397
    %v2412 = vadd.f32 %v2004, %v2397
    %v2413 = vadd.f32 %v2010, %v2397
    %v2414 = vadd.f32 %v2014, %v2397
    %v2415 = vadd.f32 %v2399, %v2331
    %v2416 = vadd.f32 %v2400, %v2334
    %v2417 = vadd.f32 %v2401, %v2339
    %v2418 = vadd.f32 %v2402, %v2342
    %v2419 = vadd.f32 %v2403, %v2347
    %v2420 = vadd.f32 %v2404, %v2350
    %v2421 = vadd.f32 %v2405, %v2355
    %v2422 = vadd.f32 %v2406, %v2358
    %v2423 = vadd.f32 %v2407, %v2363
    %v2424 = vadd.f32 %v2408, %v2366
    %v2425 = vadd.f32 %v2409, %v2371
    %v2426 = vadd.f32 %v2410, %v2374
    %v2427 = vadd.f32 %v2411, %v2379
    %v2428 = vadd.f32 %v2412, %v2382
    %v2429 = vadd.f32 %v2413, %v2387
    %v2430 = vadd.f32 %v2414, %v2390
    %2431 = vst [vmem:[#allocation14] sm:$0xff] %v2415
    %2432 = vst [vmem:[#allocation14 + $0x8] sm:$0xff] %v2416
    %2433 = vst [vmem:[#allocation14 + $0x10] sm:$0xff] %v2417
    %2434 = vst [vmem:[#allocation14 + $0x18] sm:$0xff] %v2418
    %2435 = vst [vmem:[#allocation14 + $0x20] sm:$0xff] %v2419
    %2436 = vst [vmem:[#allocation14 + $0x28] sm:$0xff] %v2420
    %2437 = vst [vmem:[#allocation14 + $0x30] sm:$0xff] %v2421
    %2438 = vst [vmem:[#allocation14 + $0x38] sm:$0xff] %v2422
    %2439 = vst [vmem:[#allocation14 + $0x40] sm:$0xff] %v2423
    %2440 = vst [vmem:[#allocation14 + $0x48] sm:$0xff] %v2424
    %2441 = vst [vmem:[#allocation14 + $0x50] sm:$0xff] %v2425
    %2442 = vst [vmem:[#allocation14 + $0x58] sm:$0xff] %v2426
    %2443 = vst [vmem:[#allocation14 + $0x60] sm:$0xff] %v2427
    %2444 = vst [vmem:[#allocation14 + $0x68] sm:$0xff] %v2428
    %2445 = vst [vmem:[#allocation14 + $0x70] sm:$0xff] %v2429
    %2446 = vst [vmem:[#allocation14 + $0x78] sm:$0xff] %v2430
    // Predicated region
    $region66: #{tpu_custom_call.1} parent=1 // pred_check
      _
    $region67: #{tpu_custom_call.1} parent=1 // pred_check_branch
      %2448 = sbr.rel (0) target = $region69
    $region68: #{tpu_custom_call.1} parent=1 // pred_region
      %s2450 = ssub.s32 2048, 2048
      %2451 = vsyncadd [#allocation4], %s2450
      %s2452 = sshll.u32 [#allocation14], 4
      %s2453 = int_to_ptr.vmem [resolvable:$true] %s2452
      %2458 = dma.vmem_to_hbm [thread:$0]  %s2453, 2048, %s9, [#allocation4], 128, 128, 8
    $region69: #{tpu_custom_call.1} parent=1 // pred_fallthru
      _
    // Predicated region
    $region70: #{tpu_custom_call.1} parent=1 // pred_check
      _
    $region71: #{tpu_custom_call.1} parent=1 // pred_check_branch
      %2460 = sbr.rel (0) target = $region73
    $region72: #{tpu_custom_call.1} parent=1 // pred_region
      %2461 = dma.done [#allocation4], 2048
    $region73: #{tpu_custom_call.1} parent=1 // pred_fallthru
      _
    %2462 = vsyncpa [#allocation3], 1
    %2463 = vsyncpa [#allocation6], 1
    %2464 = vsyncpa [#allocation9], 1
    %2465 = vsyncpa [#allocation12], 1
    %2466 = vsyncpa [#allocation4], 1

</llo_original>
